<compile_context>
chip_gen: v6e
topology: v6e:2x2x1
jax: 0.10.0
libtpu: 0.0.40
codegen_flags: <defaults>
</compile_context>

<pallas_src>
import functools

import jax
import jax.numpy as jnp
from jax import lax
from jax.experimental import pallas as pl
from jax.experimental.pallas import tpu as pltpu


# --------------------------------- kernel ---------------------------------
def _resblock_kernel(x_ref, w1_ref, b1_ref, g1_ref, bt1_ref,
                     w2_ref, b2_ref, g2_ref, bt2_ref,
                     sel_ref, selT_ref,
                     out_ref, apad_ref, *, NB, H, W, C, groups, eps):
    """Fused ResidualBlock forward for a block of NB batch elements.

    Layouts (lane-packed): rows are H, lanes are W*C with lane = w*C + c.
      x_ref    : (NB, H, W*C)        input tile
      w*_ref   : (3, W*C, W*C)       banded conv weights, one matrix per row tap dy
      b/g/bt   : (1, W*C)            bias / gamma / beta, tiled over W
      sel_ref  : (W*C, groups)       one-hot lane -> GroupNorm group
      selT_ref : (groups, W*C)
      out_ref  : (NB, H, W*C)
      apad_ref : (NB*(H+2), W*C)     VMEM scratch; per-image rows [i*(H+2) .. i*(H+2)+H+1],
                                     first/last row of each window is the zero halo.
    """
    WC = W * C
    HP = H + 2                        # padded rows per image
    L = NB * HP                       # total scratch rows
    f32 = jnp.float32

    # Zero the 2*NB halo rows every grid step (scratch persists across steps and
    # lives per-core under megacore, so never rely on a one-time init).
    zrow = jnp.zeros((1, WC), f32)
    for i in range(NB):
        apad_ref[i * HP:i * HP + 1, :] = zrow
        apad_ref[i * HP + H + 1:i * HP + H + 2, :] = zrow

    sel = sel_ref[...]                # (WC, groups)
    selT = selT_ref[...]              # (groups, WC)
    inv_cnt = 1.0 / float(H * W * (C // groups))

    def conv3x3_gn(w_ref, b_ref, g_ref, bt_ref):
        # 3x3 conv == 3 banded matmuls over the WHOLE stacked padded buffer: dx
        # shifts / zero columns are in the band structure, dy shifts are in the LHS
        # row offset.  One MXU weight push per tap for all NB images.
        t = (jnp.dot(apad_ref[0:L - 2, :], w_ref[0], preferred_element_type=f32)
             + jnp.dot(apad_ref[1:L - 1, :], w_ref[1], preferred_element_type=f32)
             + jnp.dot(apad_ref[2:L, :], w_ref[2], preferred_element_type=f32))
        bias = b_ref[...]
        gamma = g_ref[...]
        beta = bt_ref[...]

        # Per-image conv outputs (rows of t at the image seams are unused garbage).
        accs = [t[i * HP:i * HP + H, :] + bias for i in range(NB)]

        # GroupNorm: lane-stable statistics.  Stack all per-image (sum, sum^2)
        # lane rows and hit the (WC, groups) selector with ONE matmul.
        ssums = [jnp.sum(a, axis=0, keepdims=True) for a in accs]       # (1, WC)
        sqsums = [jnp.sum(a * a, axis=0, keepdims=True) for a in accs]  # (1, WC)
        stats = jnp.dot(jnp.concatenate(ssums + sqsums, axis=0), sel,
                        preferred_element_type=f32)                     # (2*NB, G)
        gmean = stats[0:NB, :] * inv_cnt                                 # (NB, G)
        gvar = stats[NB:2 * NB, :] * inv_cnt - gmean * gmean             # biased var
        ginv = lax.rsqrt(gvar + eps)
        lanes = jnp.dot(jnp.concatenate([gmean, ginv], axis=0), selT,
                        preferred_element_type=f32)                      # (2*NB, WC)

        outs = []
        for i in range(NB):
            inv_l = lanes[NB + i:NB + i + 1, :]
            mean_l = lanes[i:i + 1, :]
            scale = gamma * inv_l
            shift = beta - mean_l * scale
            outs.append(accs[i] * scale + shift)
        return outs

    # stage 1: y1 = relu(norm1(conv1(x)))
    for i in range(NB):
        apad_ref[i * HP + 1:i * HP + 1 + H, :] = x_ref[i]
    y1 = conv3x3_gn(w1_ref, b1_ref, g1_ref, bt1_ref)

    # stage 2: y2 = norm2(conv2(relu(y1))); out = relu(x + y2)
    # (shortcut is identity: stride == 1, downsample == False)
    for i in range(NB):
        apad_ref[i * HP + 1:i * HP + 1 + H, :] = jnp.maximum(y1[i], 0.0)
    y2 = conv3x3_gn(w2_ref, b2_ref, g2_ref, bt2_ref)
    for i in range(NB):
        out_ref[i, :, :] = jnp.maximum(x_ref[i] + y2[i], 0.0).astype(out_ref.dtype)


def _resblock_call(x_packed, p, *, H, W, C, groups, eps, nb):
    N = x_packed.shape[0]
    WC = W * C
    assert N % nb == 0

    kern = functools.partial(_resblock_kernel, NB=nb, H=H, W=W, C=C,
                             groups=groups, eps=eps)

    const2 = lambda n: (0, 0)
    const3 = lambda n: (0, 0, 0)
    in_specs = [
        pl.BlockSpec((nb, H, WC), lambda n: (n, 0, 0)),  # x
        pl.BlockSpec((3, WC, WC), const3),               # w1 (banded)
        pl.BlockSpec((1, WC), const2),                   # b1
        pl.BlockSpec((1, WC), const2),                   # gamma1
        pl.BlockSpec((1, WC), const2),                   # beta1
        pl.BlockSpec((3, WC, WC), const3),               # w2 (banded)
        pl.BlockSpec((1, WC), const2),                   # b2
        pl.BlockSpec((1, WC), const2),                   # gamma2
        pl.BlockSpec((1, WC), const2),                   # beta2
        pl.BlockSpec((WC, groups), const2),              # group selector
        pl.BlockSpec((groups, WC), const2),              # group selector^T
    ]

    L = nb * (H + 2)
    flops = (N // nb) * 2 * 3 * (2 * (L - 2) * WC * WC)   # 2 stages * 3 row taps
    bytes_accessed = 4 * (2 * N * H * WC + 2 * 3 * WC * WC + 8 * WC
                          + 2 * WC * groups)

    return pl.pallas_call(
        kern,
        out_shape=jax.ShapeDtypeStruct((N, H, WC), jnp.float32),
        grid_spec=pltpu.PrefetchScalarGridSpec(
            num_scalar_prefetch=0,
            grid=(N // nb,),
            in_specs=in_specs,
            out_specs=pl.BlockSpec((nb, H, WC), lambda n: (n, 0, 0)),
            scratch_shapes=[pltpu.VMEM((L, WC), jnp.float32)],
        ),
        compiler_params=pltpu.CompilerParams(
            dimension_semantics=("parallel",)),
        cost_estimate=pl.CostEstimate(flops=flops, transcendentals=0,
                                      bytes_accessed=bytes_accessed),
    )(x_packed, p["w1"], p["b1"], p["g1"], p["bt1"],
      p["w2"], p["b2"], p["g2"], p["bt2"], p["sel"], p["selT"])


# ------------------------- one-time parameter packing -------------------------
def _banded_conv_weights(w_oihw, W):
    """(O, I, 3, 3) OIHW conv weight -> (3, W*I, W*O) banded matrices (one per dy).

    bw[dy, wi*I + ci, wo*O + co] = w[co, ci, dy, wi - wo + 1] when |wi - wo| <= 1,
    else 0, so that   out_row[h] = sum_dy apad_row[h + dy] @ bw[dy]
    implements the 3x3 conv (stride 1, zero padding 1) in the lane-packed layout.
    """
    O, I, KH, KW = w_oihw.shape
    k = jnp.transpose(w_oihw, (2, 3, 1, 0)).astype(jnp.float32)   # (dy, dx, I, O)
    wi = jnp.arange(W)[:, None]
    wo = jnp.arange(W)[None, :]
    dx = wi - wo + 1                                              # (W, W)
    valid = ((dx >= 0) & (dx < KW)).astype(jnp.float32)
    dx_c = jnp.clip(dx, 0, KW - 1)
    blocks = k[:, dx_c] * valid[None, :, :, None, None]           # (3, W, W, I, O)
    return jnp.transpose(blocks, (0, 1, 3, 2, 4)).reshape(KH, W * I, W * O)


def pack_residual_block_params(w1_oihw, b1, g1, bt1, w2_oihw, b2, g2, bt2,
                               *, W, groups):
    """Hoisted out of the forward hot path: build banded weights, tiled per-lane
    bias/gamma/beta and the GroupNorm lane->group selectors once."""
    planes, cin = w1_oihw.shape[0], w1_oihw.shape[1]
    assert planes == cin, "identity residual requires in_planes == planes"
    assert planes % groups == 0

    def tile_vec(v):
        return jnp.tile(v.astype(jnp.float32), W).reshape(1, W * planes)

    cidx = jnp.arange(W * planes) % planes
    sel = (cidx[:, None] // (planes // groups)
           == jnp.arange(groups)[None, :]).astype(jnp.float32)    # (W*planes, groups)

    # TODO(synk): banded weights scale as O(W^2 * Cin * Cout); for large W tile the
    # W axis (or fall back to im2col) to bound VMEM (v7x has only 64 MiB per TC).
    return {
        "w1": _banded_conv_weights(w1_oihw, W), "b1": tile_vec(b1),
        "g1": tile_vec(g1), "bt1": tile_vec(bt1),
        "w2": _banded_conv_weights(w2_oihw, W), "b2": tile_vec(b2),
        "g2": tile_vec(g2), "bt2": tile_vec(bt2),
        "sel": sel, "selT": sel.T,
    }


def _default_batch_block(N):
    # Amortize MXU weight pushes over as many images as possible while still leaving
    # >=2 grid steps so the "parallel" batch axis can be split across megacore TCs.
    for d in (8, 4, 2):
        if N % d == 0 and N // d >= 2:
            return d
    return 1


def residual_block_forward(x_nchw, packed, *, groups, eps=1e-5, batch_block=None):
    """ResidualBlock forward: norm_fn='group', kernel 3, stride 1, residual=True,
    downsample=False (shortcut is identity).  x_nchw: (N, C, H, W) f32."""
    N, C, H, W = x_nchw.shape
    WC = W * C
    nb = _default_batch_block(N) if batch_block is None else batch_block
    assert N % nb == 0, "batch_block must divide the batch size"
    # NCHW -> NHWC -> lane-packed (N, H, W*C); the reshape is free (contiguous).
    x_packed = jnp.transpose(x_nchw, (0, 2, 3, 1)).reshape(N, H, WC)
    out_packed = _resblock_call(x_packed, packed, H=H, W=W, C=C,
                                groups=groups, eps=eps, nb=nb)
    return jnp.transpose(out_packed.reshape(N, H, W, C), (0, 3, 1, 2))
    # TODO(synk): stride!=1 / downsample=True shortcut (1x1 conv + norm3) and the
    # 'batch'/'instance'/'none' norm_fn variants are not implemented here.


# ------------------- pure-JAX reference (correctness check) -------------------
def _group_norm_ref(x_nchw, gamma, beta, groups, eps):
    N, C, H, W = x_nchw.shape
    xg = x_nchw.reshape(N, groups, C // groups, H, W)
    mean = jnp.mean(xg, axis=(2, 3, 4), keepdims=True)
    var = jnp.var(xg, axis=(2, 3, 4), keepdims=True)
    xn = ((xg - mean) * lax.rsqrt(var + eps)).reshape(N, C, H, W)
    return xn * gamma[None, :, None, None] + beta[None, :, None, None]


def _conv_ref(x_nchw, w_oihw, b):
    out = lax.conv_general_dilated(
        x_nchw, w_oihw, window_strides=(1, 1), padding=((1, 1), (1, 1)),
        dimension_numbers=("NCHW", "OIHW", "NCHW"))
    return out + b[None, :, None, None]


def residual_block_ref(x_nchw, torch_params, *, groups, eps=1e-5):
    w1, b1, g1, bt1, w2, b2, g2, bt2 = torch_params
    y = _conv_ref(x_nchw, w1, b1)
    y = jnp.maximum(_group_norm_ref(y, g1, bt1, groups, eps), 0.0)
    y = _conv_ref(y, w2, b2)
    y = _group_norm_ref(y, g2, bt2, groups, eps)
    return jnp.maximum(x_nchw + y, 0.0)


if __name__ == "__main__":
    # in_planes == planes == 16 (so the shortcut is identity), 16x16 spatial, batch 2.
    N, C, H, W = 2, 16, 16, 16
    planes = C
    groups = planes // 8   # num_groups as in the module

    key = jax.random.PRNGKey(0)
    ks = jax.random.split(key, 9)
    x = jax.random.normal(ks[0], (N, C, H, W), dtype=jnp.float32)

    w1_oihw = 0.1 * jax.random.normal(ks[1], (planes, C, 3, 3), dtype=jnp.float32)
    b1 = 0.1 * jax.random.normal(ks[2], (planes,), dtype=jnp.float32)
    w2_oihw = 0.1 * jax.random.normal(ks[3], (planes, planes, 3, 3), dtype=jnp.float32)
    b2 = 0.1 * jax.random.normal(ks[4], (planes,), dtype=jnp.float32)
    g1 = 1.0 + 0.1 * jax.random.normal(ks[5], (planes,), dtype=jnp.float32)
    beta1 = 0.1 * jax.random.normal(ks[6], (planes,), dtype=jnp.float32)
    g2 = 1.0 + 0.1 * jax.random.normal(ks[7], (planes,), dtype=jnp.float32)
    beta2 = 0.1 * jax.random.normal(ks[8], (planes,), dtype=jnp.float32)

    packed = pack_residual_block_params(
        w1_oihw, b1, g1, beta1, w2_oihw, b2, g2, beta2, W=W, groups=groups)

    ref = residual_block_ref(
        x, (w1_oihw, b1, g1, beta1, w2_oihw, b2, g2, beta2), groups=groups)

    # Default path (batch_block=1 for this tiny batch -> both megacore TCs busy).
    out = jax.block_until_ready(residual_block_forward(x, packed, groups=groups))
    assert out.shape == (N, planes, H, W)
    err = float(jnp.max(jnp.abs(out - ref)))
    assert err < 2e-3, err

    # Batch-blocked path (NB=2 images per grid step: one MXU weight push per conv
    # tap / per GN selector for the whole block).
    out2 = jax.block_until_ready(
        residual_block_forward(x, packed, groups=groups, batch_block=2))
    err2 = float(jnp.max(jnp.abs(out2 - ref)))
    assert err2 < 2e-3, err2

    print("KERNEL_OK")
</pallas_src>

<mosaic_0001>
module attributes {stable_mosaic.version = 11 : i64} {
  func.func @_resblock_kernel(%arg0: i32, %arg1: memref<1x16x256xf32, #tpu.memory_space<vmem>>, %arg2: memref<3x256x256xf32, #tpu.memory_space<vmem>>, %arg3: memref<1x256xf32, #tpu.memory_space<vmem>>, %arg4: memref<1x256xf32, #tpu.memory_space<vmem>>, %arg5: memref<1x256xf32, #tpu.memory_space<vmem>>, %arg6: memref<3x256x256xf32, #tpu.memory_space<vmem>>, %arg7: memref<1x256xf32, #tpu.memory_space<vmem>>, %arg8: memref<1x256xf32, #tpu.memory_space<vmem>>, %arg9: memref<1x256xf32, #tpu.memory_space<vmem>>, %arg10: memref<256x2xf32, #tpu.memory_space<vmem>>, %arg11: memref<2x256xf32, #tpu.memory_space<vmem>>, %arg12: memref<1x16x256xf32, #tpu.memory_space<vmem>>, %arg13: memref<18x256xf32, #tpu.memory_space<vmem>>) attributes {dimension_semantics = [#tpu.dimension_semantics<parallel>], iteration_bounds = array<i64: 2>, scalar_prefetch = 0 : i64, scratch_operands = 1 : i64, tpu.core_type = #tpu.core_type<tc>, window_params = [{transform_indices = @transform_0, window_bounds = array<i64: 1, 16, 256>}, {pipeline_mode = #tpu.pipeline_mode<synchronous>, transform_indices = @transform_1, window_bounds = array<i64: 3, 256, 256>}, {pipeline_mode = #tpu.pipeline_mode<synchronous>, transform_indices = @transform_2, window_bounds = array<i64: 1, 256>}, {pipeline_mode = #tpu.pipeline_mode<synchronous>, transform_indices = @transform_3, window_bounds = array<i64: 1, 256>}, {pipeline_mode = #tpu.pipeline_mode<synchronous>, transform_indices = @transform_4, window_bounds = array<i64: 1, 256>}, {pipeline_mode = #tpu.pipeline_mode<synchronous>, transform_indices = @transform_5, window_bounds = array<i64: 3, 256, 256>}, {pipeline_mode = #tpu.pipeline_mode<synchronous>, transform_indices = @transform_6, window_bounds = array<i64: 1, 256>}, {pipeline_mode = #tpu.pipeline_mode<synchronous>, transform_indices = @transform_7, window_bounds = array<i64: 1, 256>}, {pipeline_mode = #tpu.pipeline_mode<synchronous>, transform_indices = @transform_8, window_bounds = array<i64: 1, 256>}, {pipeline_mode = #tpu.pipeline_mode<synchronous>, transform_indices = @transform_9, window_bounds = array<i64: 256, 2>}, {pipeline_mode = #tpu.pipeline_mode<synchronous>, transform_indices = @transform_10, window_bounds = array<i64: 2, 256>}, {transform_indices = @transform_11, window_bounds = array<i64: 1, 16, 256>}]} {
    %cst = arith.constant 0.000000e+00 : f32
    %0 = vector.broadcast %cst : f32 to vector<1x256xf32>
    %c0 = arith.constant 0 : index
    %c0_0 = arith.constant 0 : index
    %1 = vector.load %arg13[%c0, %c0_0] : memref<18x256xf32, #tpu.memory_space<vmem>>, vector<1x256xf32>
    tpu.vector_store %arg13[%c0, %c0_0], %0 {strides = array<i32>} : memref<18x256xf32, #tpu.memory_space<vmem>>, vector<1x256xf32>,
    %c17 = arith.constant 17 : index
    %c0_1 = arith.constant 0 : index
    %2 = vector.load %arg13[%c17, %c0_1] : memref<18x256xf32, #tpu.memory_space<vmem>>, vector<1x256xf32>
    tpu.vector_store %arg13[%c17, %c0_1], %0 {strides = array<i32>} : memref<18x256xf32, #tpu.memory_space<vmem>>, vector<1x256xf32>,
    %c0_2 = arith.constant 0 : index
    %c0_3 = arith.constant 0 : index
    %3 = vector.load %arg10[%c0_2, %c0_3] : memref<256x2xf32, #tpu.memory_space<vmem>>, vector<256x2xf32>
    %c0_4 = arith.constant 0 : index
    %c0_5 = arith.constant 0 : index
    %4 = vector.load %arg11[%c0_4, %c0_5] : memref<2x256xf32, #tpu.memory_space<vmem>>, vector<2x256xf32>
    %c0_6 = arith.constant 0 : index
    %c0_7 = arith.constant 0 : index
    %c0_8 = arith.constant 0 : index
    %5 = vector.load %arg1[%c0_6, %c0_7, %c0_8] : memref<1x16x256xf32, #tpu.memory_space<vmem>>, vector<1x16x256xf32>
    %6 = vector.shape_cast %5 : vector<1x16x256xf32> to vector<16x256xf32>
    %c1 = arith.constant 1 : index
    %c0_9 = arith.constant 0 : index
    %7 = vector.load %arg13[%c1, %c0_9] : memref<18x256xf32, #tpu.memory_space<vmem>>, vector<16x256xf32>
    tpu.vector_store %arg13[%c1, %c0_9], %6 {strides = array<i32>} : memref<18x256xf32, #tpu.memory_space<vmem>>, vector<16x256xf32>,
    %c0_10 = arith.constant 0 : index
    %c0_11 = arith.constant 0 : index
    %8 = vector.load %arg13[%c0_10, %c0_11] : memref<18x256xf32, #tpu.memory_space<vmem>>, vector<16x256xf32>
    %c0_12 = arith.constant 0 : index
    %c0_13 = arith.constant 0 : index
    %c0_14 = arith.constant 0 : index
    %9 = vector.load %arg2[%c0_12, %c0_13, %c0_14] : memref<3x256x256xf32, #tpu.memory_space<vmem>>, vector<1x256x256xf32>
    %10 = vector.shape_cast %9 : vector<1x256x256xf32> to vector<256x256xf32>
    %cst_15 = arith.constant dense<0.000000e+00> : vector<16x256xf32>
    %11 = tpu.matmul %8, %10, %cst_15 {dimension_numbers = #tpu.dot_dimension_numbers<[1], [0], [0], [1], [0, 0, 1, 1], [], []>} : vector<16x256xf32>, vector<256x256xf32>, vector<16x256xf32> -> vector<16x256xf32>
    %c1_16 = arith.constant 1 : index
    %c0_17 = arith.constant 0 : index
    %12 = vector.load %arg13[%c1_16, %c0_17] : memref<18x256xf32, #tpu.memory_space<vmem>>, vector<16x256xf32>
    %c1_18 = arith.constant 1 : index
    %c0_19 = arith.constant 0 : index
    %c0_20 = arith.constant 0 : index
    %13 = vector.load %arg2[%c1_18, %c0_19, %c0_20] : memref<3x256x256xf32, #tpu.memory_space<vmem>>, vector<1x256x256xf32>
    %14 = vector.shape_cast %13 : vector<1x256x256xf32> to vector<256x256xf32>
    %cst_21 = arith.constant dense<0.000000e+00> : vector<16x256xf32>
    %15 = tpu.matmul %12, %14, %cst_21 {dimension_numbers = #tpu.dot_dimension_numbers<[1], [0], [0], [1], [0, 0, 1, 1], [], []>} : vector<16x256xf32>, vector<256x256xf32>, vector<16x256xf32> -> vector<16x256xf32>
    %16 = arith.addf %11, %15 : vector<16x256xf32>
    %c2 = arith.constant 2 : index
    %c0_22 = arith.constant 0 : index
    %17 = vector.load %arg13[%c2, %c0_22] : memref<18x256xf32, #tpu.memory_space<vmem>>, vector<16x256xf32>
    %c2_23 = arith.constant 2 : index
    %c0_24 = arith.constant 0 : index
    %c0_25 = arith.constant 0 : index
    %18 = vector.load %arg2[%c2_23, %c0_24, %c0_25] : memref<3x256x256xf32, #tpu.memory_space<vmem>>, vector<1x256x256xf32>
    %19 = vector.shape_cast %18 : vector<1x256x256xf32> to vector<256x256xf32>
    %cst_26 = arith.constant dense<0.000000e+00> : vector<16x256xf32>
    %20 = tpu.matmul %17, %19, %cst_26 {dimension_numbers = #tpu.dot_dimension_numbers<[1], [0], [0], [1], [0, 0, 1, 1], [], []>} : vector<16x256xf32>, vector<256x256xf32>, vector<16x256xf32> -> vector<16x256xf32>
    %21 = arith.addf %16, %20 : vector<16x256xf32>
    %c0_27 = arith.constant 0 : index
    %c0_28 = arith.constant 0 : index
    %22 = vector.load %arg3[%c0_27, %c0_28] : memref<1x256xf32, #tpu.memory_space<vmem>>, vector<1x256xf32>
    %c0_29 = arith.constant 0 : index
    %c0_30 = arith.constant 0 : index
    %23 = vector.load %arg4[%c0_29, %c0_30] : memref<1x256xf32, #tpu.memory_space<vmem>>, vector<1x256xf32>
    %c0_31 = arith.constant 0 : index
    %c0_32 = arith.constant 0 : index
    %24 = vector.load %arg5[%c0_31, %c0_32] : memref<1x256xf32, #tpu.memory_space<vmem>>, vector<1x256xf32>
    %25 = vector.broadcast %22 : vector<1x256xf32> to vector<16x256xf32>
    %26 = arith.addf %21, %25 : vector<16x256xf32>
    %cst_33 = arith.constant dense<0.000000e+00> : vector<256xf32>
    %27 = vector.multi_reduction <add>, %26, %cst_33 [0] : vector<16x256xf32> to vector<256xf32>
    %28 = vector.shape_cast %27 : vector<256xf32> to vector<1x256xf32>
    %29 = arith.mulf %26, %26 : vector<16x256xf32>
    %cst_34 = arith.constant dense<0.000000e+00> : vector<256xf32>
    %30 = vector.multi_reduction <add>, %29, %cst_34 [0] : vector<16x256xf32> to vector<256xf32>
    %31 = vector.shape_cast %30 : vector<256xf32> to vector<1x256xf32>
    %32 = tpu.concatenate %28, %31 in 0 : vector<1x256xf32>, vector<1x256xf32> -> vector<2x256xf32>
    %cst_35 = arith.constant dense<0.000000e+00> : vector<2x2xf32>
    %33 = tpu.matmul %32, %3, %cst_35 {dimension_numbers = #tpu.dot_dimension_numbers<[1], [0], [0], [1], [0, 0, 1, 1], [], []>} : vector<2x256xf32>, vector<256x2xf32>, vector<2x2xf32> -> vector<2x2xf32>
    %34 = vector.extract_strided_slice %33 {offsets = [0, 0], sizes = [1, 2], strides = [1, 1]} : vector<2x2xf32> to vector<1x2xf32>
    %cst_36 = arith.constant 4.8828125E-4 : f32
    %35 = vector.broadcast %cst_36 : f32 to vector<1x2xf32>
    %36 = arith.mulf %34, %35 : vector<1x2xf32>
    %37 = vector.extract_strided_slice %33 {offsets = [1, 0], sizes = [1, 2], strides = [1, 1]} : vector<2x2xf32> to vector<1x2xf32>
    %cst_37 = arith.constant 4.8828125E-4 : f32
    %38 = vector.broadcast %cst_37 : f32 to vector<1x2xf32>
    %39 = arith.mulf %37, %38 : vector<1x2xf32>
    %40 = arith.mulf %36, %36 : vector<1x2xf32>
    %41 = arith.subf %39, %40 : vector<1x2xf32>
    %cst_38 = arith.constant 9.99999974E-6 : f32
    %42 = vector.broadcast %cst_38 : f32 to vector<1x2xf32>
    %43 = arith.addf %41, %42 : vector<1x2xf32>
    %44 = math.rsqrt %43 : vector<1x2xf32>
    %45 = tpu.concatenate %36, %44 in 0 : vector<1x2xf32>, vector<1x2xf32> -> vector<2x2xf32>
    %cst_39 = arith.constant dense<0.000000e+00> : vector<2x256xf32>
    %46 = tpu.matmul %45, %4, %cst_39 {dimension_numbers = #tpu.dot_dimension_numbers<[1], [0], [0], [1], [0, 0, 1, 1], [], []>} : vector<2x2xf32>, vector<2x256xf32>, vector<2x256xf32> -> vector<2x256xf32>
    %47 = vector.extract_strided_slice %46 {offsets = [1, 0], sizes = [1, 256], strides = [1, 1]} : vector<2x256xf32> to vector<1x256xf32>
    %48 = vector.extract_strided_slice %46 {offsets = [0, 0], sizes = [1, 256], strides = [1, 1]} : vector<2x256xf32> to vector<1x256xf32>
    %49 = arith.mulf %23, %47 : vector<1x256xf32>
    %50 = arith.mulf %48, %49 : vector<1x256xf32>
    %51 = arith.subf %24, %50 : vector<1x256xf32>
    %52 = vector.broadcast %49 : vector<1x256xf32> to vector<16x256xf32>
    %53 = arith.mulf %26, %52 : vector<16x256xf32>
    %54 = vector.broadcast %51 : vector<1x256xf32> to vector<16x256xf32>
    %55 = arith.addf %53, %54 : vector<16x256xf32>
    %cst_40 = arith.constant 0.000000e+00 : f32
    %56 = vector.broadcast %cst_40 : f32 to vector<16x256xf32>
    %57 = arith.maximumf %55, %56 : vector<16x256xf32>
    %c1_41 = arith.constant 1 : index
    %c0_42 = arith.constant 0 : index
    %58 = vector.load %arg13[%c1_41, %c0_42] : memref<18x256xf32, #tpu.memory_space<vmem>>, vector<16x256xf32>
    tpu.vector_store %arg13[%c1_41, %c0_42], %57 {strides = array<i32>} : memref<18x256xf32, #tpu.memory_space<vmem>>, vector<16x256xf32>,
    %c0_43 = arith.constant 0 : index
    %c0_44 = arith.constant 0 : index
    %59 = vector.load %arg13[%c0_43, %c0_44] : memref<18x256xf32, #tpu.memory_space<vmem>>, vector<16x256xf32>
    %c0_45 = arith.constant 0 : index
    %c0_46 = arith.constant 0 : index
    %c0_47 = arith.constant 0 : index
    %60 = vector.load %arg6[%c0_45, %c0_46, %c0_47] : memref<3x256x256xf32, #tpu.memory_space<vmem>>, vector<1x256x256xf32>
    %61 = vector.shape_cast %60 : vector<1x256x256xf32> to vector<256x256xf32>
    %cst_48 = arith.constant dense<0.000000e+00> : vector<16x256xf32>
    %62 = tpu.matmul %59, %61, %cst_48 {dimension_numbers = #tpu.dot_dimension_numbers<[1], [0], [0], [1], [0, 0, 1, 1], [], []>} : vector<16x256xf32>, vector<256x256xf32>, vector<16x256xf32> -> vector<16x256xf32>
    %c1_49 = arith.constant 1 : index
    %c0_50 = arith.constant 0 : index
    %63 = vector.load %arg13[%c1_49, %c0_50] : memref<18x256xf32, #tpu.memory_space<vmem>>, vector<16x256xf32>
    %c1_51 = arith.constant 1 : index
    %c0_52 = arith.constant 0 : index
    %c0_53 = arith.constant 0 : index
    %64 = vector.load %arg6[%c1_51, %c0_52, %c0_53] : memref<3x256x256xf32, #tpu.memory_space<vmem>>, vector<1x256x256xf32>
    %65 = vector.shape_cast %64 : vector<1x256x256xf32> to vector<256x256xf32>
    %cst_54 = arith.constant dense<0.000000e+00> : vector<16x256xf32>
    %66 = tpu.matmul %63, %65, %cst_54 {dimension_numbers = #tpu.dot_dimension_numbers<[1], [0], [0], [1], [0, 0, 1, 1], [], []>} : vector<16x256xf32>, vector<256x256xf32>, vector<16x256xf32> -> vector<16x256xf32>
    %67 = arith.addf %62, %66 : vector<16x256xf32>
    %c2_55 = arith.constant 2 : index
    %c0_56 = arith.constant 0 : index
    %68 = vector.load %arg13[%c2_55, %c0_56] : memref<18x256xf32, #tpu.memory_space<vmem>>, vector<16x256xf32>
    %c2_57 = arith.constant 2 : index
    %c0_58 = arith.constant 0 : index
    %c0_59 = arith.constant 0 : index
    %69 = vector.load %arg6[%c2_57, %c0_58, %c0_59] : memref<3x256x256xf32, #tpu.memory_space<vmem>>, vector<1x256x256xf32>
    %70 = vector.shape_cast %69 : vector<1x256x256xf32> to vector<256x256xf32>
    %cst_60 = arith.constant dense<0.000000e+00> : vector<16x256xf32>
    %71 = tpu.matmul %68, %70, %cst_60 {dimension_numbers = #tpu.dot_dimension_numbers<[1], [0], [0], [1], [0, 0, 1, 1], [], []>} : vector<16x256xf32>, vector<256x256xf32>, vector<16x256xf32> -> vector<16x256xf32>
    %72 = arith.addf %67, %71 : vector<16x256xf32>
    %c0_61 = arith.constant 0 : index
    %c0_62 = arith.constant 0 : index
    %73 = vector.load %arg7[%c0_61, %c0_62] : memref<1x256xf32, #tpu.memory_space<vmem>>, vector<1x256xf32>
    %c0_63 = arith.constant 0 : index
    %c0_64 = arith.constant 0 : index
    %74 = vector.load %arg8[%c0_63, %c0_64] : memref<1x256xf32, #tpu.memory_space<vmem>>, vector<1x256xf32>
    %c0_65 = arith.constant 0 : index
    %c0_66 = arith.constant 0 : index
    %75 = vector.load %arg9[%c0_65, %c0_66] : memref<1x256xf32, #tpu.memory_space<vmem>>, vector<1x256xf32>
    %76 = vector.broadcast %73 : vector<1x256xf32> to vector<16x256xf32>
    %77 = arith.addf %72, %76 : vector<16x256xf32>
    %cst_67 = arith.constant dense<0.000000e+00> : vector<256xf32>
    %78 = vector.multi_reduction <add>, %77, %cst_67 [0] : vector<16x256xf32> to vector<256xf32>
    %79 = vector.shape_cast %78 : vector<256xf32> to vector<1x256xf32>
    %80 = arith.mulf %77, %77 : vector<16x256xf32>
    %cst_68 = arith.constant dense<0.000000e+00> : vector<256xf32>
    %81 = vector.multi_reduction <add>, %80, %cst_68 [0] : vector<16x256xf32> to vector<256xf32>
    %82 = vector.shape_cast %81 : vector<256xf32> to vector<1x256xf32>
    %83 = tpu.concatenate %79, %82 in 0 : vector<1x256xf32>, vector<1x256xf32> -> vector<2x256xf32>
    %cst_69 = arith.constant dense<0.000000e+00> : vector<2x2xf32>
    %84 = tpu.matmul %83, %3, %cst_69 {dimension_numbers = #tpu.dot_dimension_numbers<[1], [0], [0], [1], [0, 0, 1, 1], [], []>} : vector<2x256xf32>, vector<256x2xf32>, vector<2x2xf32> -> vector<2x2xf32>
    %85 = vector.extract_strided_slice %84 {offsets = [0, 0], sizes = [1, 2], strides = [1, 1]} : vector<2x2xf32> to vector<1x2xf32>
    %cst_70 = arith.constant 4.8828125E-4 : f32
    %86 = vector.broadcast %cst_70 : f32 to vector<1x2xf32>
    %87 = arith.mulf %85, %86 : vector<1x2xf32>
    %88 = vector.extract_strided_slice %84 {offsets = [1, 0], sizes = [1, 2], strides = [1, 1]} : vector<2x2xf32> to vector<1x2xf32>
    %cst_71 = arith.constant 4.8828125E-4 : f32
    %89 = vector.broadcast %cst_71 : f32 to vector<1x2xf32>
    %90 = arith.mulf %88, %89 : vector<1x2xf32>
    %91 = arith.mulf %87, %87 : vector<1x2xf32>
    %92 = arith.subf %90, %91 : vector<1x2xf32>
    %cst_72 = arith.constant 9.99999974E-6 : f32
    %93 = vector.broadcast %cst_72 : f32 to vector<1x2xf32>
    %94 = arith.addf %92, %93 : vector<1x2xf32>
    %95 = math.rsqrt %94 : vector<1x2xf32>
    %96 = tpu.concatenate %87, %95 in 0 : vector<1x2xf32>, vector<1x2xf32> -> vector<2x2xf32>
    %cst_73 = arith.constant dense<0.000000e+00> : vector<2x256xf32>
    %97 = tpu.matmul %96, %4, %cst_73 {dimension_numbers = #tpu.dot_dimension_numbers<[1], [0], [0], [1], [0, 0, 1, 1], [], []>} : vector<2x2xf32>, vector<2x256xf32>, vector<2x256xf32> -> vector<2x256xf32>
    %98 = vector.extract_strided_slice %97 {offsets = [1, 0], sizes = [1, 256], strides = [1, 1]} : vector<2x256xf32> to vector<1x256xf32>
    %99 = vector.extract_strided_slice %97 {offsets = [0, 0], sizes = [1, 256], strides = [1, 1]} : vector<2x256xf32> to vector<1x256xf32>
    %100 = arith.mulf %74, %98 : vector<1x256xf32>
    %101 = arith.mulf %99, %100 : vector<1x256xf32>
    %102 = arith.subf %75, %101 : vector<1x256xf32>
    %103 = vector.broadcast %100 : vector<1x256xf32> to vector<16x256xf32>
    %104 = arith.mulf %77, %103 : vector<16x256xf32>
    %105 = vector.broadcast %102 : vector<1x256xf32> to vector<16x256xf32>
    %106 = arith.addf %104, %105 : vector<16x256xf32>
    %c0_74 = arith.constant 0 : index
    %c0_75 = arith.constant 0 : index
    %c0_76 = arith.constant 0 : index
    %107 = vector.load %arg1[%c0_74, %c0_75, %c0_76] : memref<1x16x256xf32, #tpu.memory_space<vmem>>, vector<1x16x256xf32>
    %108 = vector.shape_cast %107 : vector<1x16x256xf32> to vector<16x256xf32>
    %109 = arith.addf %108, %106 : vector<16x256xf32>
    %cst_77 = arith.constant 0.000000e+00 : f32
    %110 = vector.broadcast %cst_77 : f32 to vector<16x256xf32>
    %111 = arith.maximumf %109, %110 : vector<16x256xf32>
    %c0_78 = arith.constant 0 : index
    %c0_79 = arith.constant 0 : index
    %c0_80 = arith.constant 0 : index
    %112 = vector.load %arg12[%c0_78, %c0_79, %c0_80] : memref<1x16x256xf32, #tpu.memory_space<vmem>>, vector<1x16x256xf32>
    %113 = vector.shape_cast %112 : vector<1x16x256xf32> to vector<16x256xf32>
    %114 = vector.shape_cast %111 : vector<16x256xf32> to vector<1x16x256xf32>
    tpu.vector_store %arg12[%c0_78, %c0_79, %c0_80], %114 {strides = array<i32>} : memref<1x16x256xf32, #tpu.memory_space<vmem>>, vector<1x16x256xf32>,
    return
  }
  func.func @transform_0(%arg0: i32) -> (i32, i32, i32) {
    %c0_i32 = arith.constant 0 : i32
    %c0_i32_0 = arith.constant 0 : i32
    %c0_i32_1 = arith.constant 0 : i32
    return %arg0, %c0_i32, %c0_i32_0 : i32, i32, i32
  }
  func.func @transform_1(%arg0: i32) -> (i32, i32, i32) {
    %c0_i32 = arith.constant 0 : i32
    %c0_i32_0 = arith.constant 0 : i32
    %c0_i32_1 = arith.constant 0 : i32
    %c0_i32_2 = arith.constant 0 : i32
    return %c0_i32, %c0_i32_0, %c0_i32_1 : i32, i32, i32
  }
  func.func @transform_2(%arg0: i32) -> (i32, i32) {
    %c0_i32 = arith.constant 0 : i32
    %c0_i32_0 = arith.constant 0 : i32
    %c0_i32_1 = arith.constant 0 : i32
    return %c0_i32, %c0_i32_0 : i32, i32
  }
  func.func @transform_3(%arg0: i32) -> (i32, i32) {
    %c0_i32 = arith.constant 0 : i32
    %c0_i32_0 = arith.constant 0 : i32
    %c0_i32_1 = arith.constant 0 : i32
    return %c0_i32, %c0_i32_0 : i32, i32
  }
  func.func @transform_4(%arg0: i32) -> (i32, i32) {
    %c0_i32 = arith.constant 0 : i32
    %c0_i32_0 = arith.constant 0 : i32
    %c0_i32_1 = arith.constant 0 : i32
    return %c0_i32, %c0_i32_0 : i32, i32
  }
  func.func @transform_5(%arg0: i32) -> (i32, i32, i32) {
    %c0_i32 = arith.constant 0 : i32
    %c0_i32_0 = arith.constant 0 : i32
    %c0_i32_1 = arith.constant 0 : i32
    %c0_i32_2 = arith.constant 0 : i32
    return %c0_i32, %c0_i32_0, %c0_i32_1 : i32, i32, i32
  }
  func.func @transform_6(%arg0: i32) -> (i32, i32) {
    %c0_i32 = arith.constant 0 : i32
    %c0_i32_0 = arith.constant 0 : i32
    %c0_i32_1 = arith.constant 0 : i32
    return %c0_i32, %c0_i32_0 : i32, i32
  }
  func.func @transform_7(%arg0: i32) -> (i32, i32) {
    %c0_i32 = arith.constant 0 : i32
    %c0_i32_0 = arith.constant 0 : i32
    %c0_i32_1 = arith.constant 0 : i32
    return %c0_i32, %c0_i32_0 : i32, i32
  }
  func.func @transform_8(%arg0: i32) -> (i32, i32) {
    %c0_i32 = arith.constant 0 : i32
    %c0_i32_0 = arith.constant 0 : i32
    %c0_i32_1 = arith.constant 0 : i32
    return %c0_i32, %c0_i32_0 : i32, i32
  }
  func.func @transform_9(%arg0: i32) -> (i32, i32) {
    %c0_i32 = arith.constant 0 : i32
    %c0_i32_0 = arith.constant 0 : i32
    %c0_i32_1 = arith.constant 0 : i32
    return %c0_i32, %c0_i32_0 : i32, i32
  }
  func.func @transform_10(%arg0: i32) -> (i32, i32) {
    %c0_i32 = arith.constant 0 : i32
    %c0_i32_0 = arith.constant 0 : i32
    %c0_i32_1 = arith.constant 0 : i32
    return %c0_i32, %c0_i32_0 : i32, i32
  }
  func.func @transform_11(%arg0: i32) -> (i32, i32, i32) {
    %c0_i32 = arith.constant 0 : i32
    %c0_i32_0 = arith.constant 0 : i32
    %c0_i32_1 = arith.constant 0 : i32
    return %arg0, %c0_i32, %c0_i32_0 : i32, i32, i32
  }
}

</mosaic_0001>

<llo_original>
// kernel: tpu_custom_call.1
$region0: #{tpu_custom_call.1}
  #allocation0 [shape = 'u32[]', space=smem, size = 0x4, offset = 0x4, fixed_abs, tag = 'smem constant byte address 0x4 - core index']
  #allocation1 [shape = 'u32[144,128]{1,0:T(1,128)}', space=vmem, size = 0x12000, scoped, tag = 'internal scratch']
  #allocation2 [shape = 'f32[18,256]{1,0:T(8,128)}', space=vmem, size = 0x6000, scoped, tag = 'scratch operand']
  %s0 = inlined_call_operand.vmem [shape: f32[2,16,256], index: 0, kind: input, shape index: {}]
  %s1 = inlined_call_operand.hbm [shape: f32[3,256,256], index: 1, kind: input, shape index: {}]
  %s2 = inlined_call_operand.vmem [shape: f32[1,256], index: 2, kind: input, shape index: {}]
  %s3 = inlined_call_operand.vmem [shape: f32[1,256], index: 3, kind: input, shape index: {}]
  %s4 = inlined_call_operand.vmem [shape: f32[1,256], index: 4, kind: input, shape index: {}]
  %s5 = inlined_call_operand.hbm [shape: f32[3,256,256], index: 5, kind: input, shape index: {}]
  %s6 = inlined_call_operand.vmem [shape: f32[1,256], index: 6, kind: input, shape index: {}]
  %s7 = inlined_call_operand.vmem [shape: f32[1,256], index: 7, kind: input, shape index: {}]
  %s8 = inlined_call_operand.vmem [shape: f32[1,256], index: 8, kind: input, shape index: {}]
  %s9 = inlined_call_operand.vmem [shape: f32[256,2], index: 9, kind: input, shape index: {}]
  %s10 = inlined_call_operand.vmem [shape: f32[2,256], index: 10, kind: input, shape index: {}]
  %s11 = inlined_call_operand.hbm [shape: f32[2,16,256], index: 11, kind: output, shape index: {}]
  %s12 = sld [smem:[#allocation0]]
  $region85: #{tpu_custom_call.1} parent=0
    _
  %s14 = ssub.s32 1, %s12
  %s15 = scalar_select 0, %s14, %s12
  $region1: #{tpu_custom_call.1} parent=0
    #allocation3 [shape = 'u8[786432]{0}', space=vmem, size = 0xc0000, scoped, tag = 'input window, operand 1, single buffered']
    #allocation4 [shape = 's32[2]{0}', space=sflag, size = 0x8, scoped, tag = 'scoped memory for tpu_custom_call.1']
    #allocation5 [shape = 's32[2]{0}', space=sflag, size = 0x8, scoped, tag = 'scoped memory for tpu_custom_call.1']
    #allocation6 [shape = 'u8[786432]{0}', space=vmem, size = 0xc0000, scoped, tag = 'input window, operand 5, single buffered']
    #allocation7 [shape = 's32[1]{0}', space=sflag, size = 0x4, scoped, tag = 'scoped memory for tpu_custom_call.1']
    #allocation8 [shape = 'u8[32768]{0}', space=vmem, size = 0x8000, scoped, tag = 'output window, operand 0']
    %16 = vsyncpa [#allocation4], 0
    %17 = vsyncpa [#allocation7], 0
    %18 = vsyncpa [#allocation5], 0
    %s19 = scalar_lea.sflag [#allocation5], 1
    %20 = vsyncpa %s19, 0
    loop: start=0, step=1, limit=4
    $region2: #{tpu_custom_call.1} parent=1 // loop_pre_header
      _
    $region3: #{tpu_custom_call.1} parent=1 // loop_header
      %s22 = sphi 0, %s26
      %p23 = scmp.ge.s32.totalorder %s22, 4
      %s32 = sphi 0, %s34
      %s35 = sphi 0, %s32
      %s36 = sphi 0, %s35
      %s52 = sphi 0, %s36
      %s56 = sphi 0, %s56
      %s58 = sphi 0, %s56
      %s59 = sphi 0, %s58
      %s73 = sphi 0, %s59
      %s77 = sphi 0, %s77
      %s79 = sphi 0, %s77
      %s80 = sphi 0, %s79
      %s94 = sphi 0, %s80
      %s98 = sphi 0, %s98
      %s100 = sphi 0, %s98
      %s101 = sphi 0, %s100
      %s115 = sphi 0, %s101
      %s119 = sphi 0, %s119
      %s121 = sphi 0, %s119
      %s122 = sphi 0, %s121
      %s136 = sphi 0, %s122
      %s140 = sphi 0, %s140
      %s142 = sphi 0, %s140
      %s143 = sphi 0, %s142
      %s157 = sphi 0, %s143
      %s161 = sphi 0, %s161
      %s163 = sphi 0, %s161
      %s164 = sphi 0, %s163
      %s178 = sphi 0, %s164
      %s182 = sphi 0, %s182
      %s184 = sphi 0, %s182
      %s185 = sphi 0, %s184
      %s199 = sphi 0, %s185
      %s203 = sphi 0, %s203
      %s205 = sphi 0, %s203
      %s206 = sphi 0, %s205
      %s220 = sphi 0, %s206
      %s224 = sphi 0, %s224
      %s226 = sphi 0, %s224
      %s227 = sphi 0, %s226
      %s241 = sphi 0, %s227
      %s245 = sphi 0, %s245
      %s247 = sphi 0, %s245
      %s248 = sphi 0, %s247
      %s262 = sphi 0, %s248
      %s268 = sphi 0, %s270
      %s271 = sphi 0, %s268
      %s272 = sphi 0, %s271
      %s288 = sphi 0, %s272
    $region4: #{tpu_custom_call.1} parent=1 // loop_header_branch
      %25 = sbr.rel (%p23) target = $region8
    $region5: #{tpu_custom_call.1} parent=1 // loop_body
      %s27 = ssub.s32 %s22, 1
      %s28 = ssub.s32 %s22, 2
      %s29 = sadd.s32 %s22, 1
      %s30 = ssub.s32 %s22, %s29
      %p31 = scmp.eq.s32.totalorder %s30, 0
      %s33 = sadd.s32 %s32, 1
      %s34 = scalar_select %p31, %s32, %s33
      %p37 = pneg %p31
      %p38 = scmp.eq.s32.totalorder %s22, 1
      %p39 = por %p37, %p38
      %p40 = scmp.ne.s32.totalorder %s32, %s35
      %p41 = scmp.eq.s32.totalorder %s22, 0
      %p42 = por %p40, %p41
      %p43 = scmp.ne.s32.totalorder %s32, %s35
      %p44 = scmp.eq.s32.totalorder %s27, 1
      %p45 = por %p43, %p44
      %p46 = scmp.ne.s32.totalorder %s35, %s36
      %p47 = scmp.eq.s32.totalorder %s27, 0
      %p48 = por %p46, %p47
      %p49 = scmp.ne.s32.totalorder %s35, %s36
      %p50 = scmp.eq.s32.totalorder %s28, 1
      %p51 = por %p49, %p50
      %p53 = scmp.ne.s32.totalorder %s36, %s52
      %p54 = scmp.eq.s32.totalorder %s28, 0
      %p55 = por %p53, %p54
      %s57 = sadd.s32 %s56, 1
      %p60 = scmp.eq.s32.totalorder %s22, 1
      %p61 = scmp.ne.s32.totalorder %s56, %s58
      %p62 = scmp.eq.s32.totalorder %s22, 0
      %p63 = por %p61, %p62
      %p64 = scmp.ne.s32.totalorder %s56, %s58
      %p65 = scmp.eq.s32.totalorder %s27, 1
      %p66 = por %p64, %p65
      %p67 = scmp.ne.s32.totalorder %s58, %s59
      %p68 = scmp.eq.s32.totalorder %s27, 0
      %p69 = por %p67, %p68
      %p70 = scmp.ne.s32.totalorder %s58, %s59
      %p71 = scmp.eq.s32.totalorder %s28, 1
      %p72 = por %p70, %p71
      %p74 = scmp.ne.s32.totalorder %s59, %s73
      %p75 = scmp.eq.s32.totalorder %s28, 0
      %p76 = por %p74, %p75
      %s78 = sadd.s32 %s77, 1
      %p81 = scmp.eq.s32.totalorder %s22, 1
      %p82 = scmp.ne.s32.totalorder %s77, %s79
      %p83 = scmp.eq.s32.totalorder %s22, 0
      %p84 = por %p82, %p83
      %p85 = scmp.ne.s32.totalorder %s77, %s79
      %p86 = scmp.eq.s32.totalorder %s27, 1
      %p87 = por %p85, %p86
      %p88 = scmp.ne.s32.totalorder %s79, %s80
      %p89 = scmp.eq.s32.totalorder %s27, 0
      %p90 = por %p88, %p89
      %p91 = scmp.ne.s32.totalorder %s79, %s80
      %p92 = scmp.eq.s32.totalorder %s28, 1
      %p93 = por %p91, %p92
      %p95 = scmp.ne.s32.totalorder %s80, %s94
      %p96 = scmp.eq.s32.totalorder %s28, 0
      %p97 = por %p95, %p96
      %s99 = sadd.s32 %s98, 1
      %p102 = scmp.eq.s32.totalorder %s22, 1
      %p103 = scmp.ne.s32.totalorder %s98, %s100
      %p104 = scmp.eq.s32.totalorder %s22, 0
      %p105 = por %p103, %p104
      %p106 = scmp.ne.s32.totalorder %s98, %s100
      %p107 = scmp.eq.s32.totalorder %s27, 1
      %p108 = por %p106, %p107
      %p109 = scmp.ne.s32.totalorder %s100, %s101
      %p110 = scmp.eq.s32.totalorder %s27, 0
      %p111 = por %p109, %p110
      %p112 = scmp.ne.s32.totalorder %s100, %s101
      %p113 = scmp.eq.s32.totalorder %s28, 1
      %p114 = por %p112, %p113
      %p116 = scmp.ne.s32.totalorder %s101, %s115
      %p117 = scmp.eq.s32.totalorder %s28, 0
      %p118 = por %p116, %p117
      %s120 = sadd.s32 %s119, 1
      %p123 = scmp.eq.s32.totalorder %s22, 1
      %p124 = scmp.ne.s32.totalorder %s119, %s121
      %p125 = scmp.eq.s32.totalorder %s22, 0
      %p126 = por %p124, %p125
      %p127 = scmp.ne.s32.totalorder %s119, %s121
      %p128 = scmp.eq.s32.totalorder %s27, 1
      %p129 = por %p127, %p128
      %p130 = scmp.ne.s32.totalorder %s121, %s122
      %p131 = scmp.eq.s32.totalorder %s27, 0
      %p132 = por %p130, %p131
      %p133 = scmp.ne.s32.totalorder %s121, %s122
      %p134 = scmp.eq.s32.totalorder %s28, 1
      %p135 = por %p133, %p134
      %p137 = scmp.ne.s32.totalorder %s122, %s136
      %p138 = scmp.eq.s32.totalorder %s28, 0
      %p139 = por %p137, %p138
      %s141 = sadd.s32 %s140, 1
      %p144 = scmp.eq.s32.totalorder %s22, 1
      %p145 = scmp.ne.s32.totalorder %s140, %s142
      %p146 = scmp.eq.s32.totalorder %s22, 0
      %p147 = por %p145, %p146
      %p148 = scmp.ne.s32.totalorder %s140, %s142
      %p149 = scmp.eq.s32.totalorder %s27, 1
      %p150 = por %p148, %p149
      %p151 = scmp.ne.s32.totalorder %s142, %s143
      %p152 = scmp.eq.s32.totalorder %s27, 0
      %p153 = por %p151, %p152
      %p154 = scmp.ne.s32.totalorder %s142, %s143
      %p155 = scmp.eq.s32.totalorder %s28, 1
      %p156 = por %p154, %p155
      %p158 = scmp.ne.s32.totalorder %s143, %s157
      %p159 = scmp.eq.s32.totalorder %s28, 0
      %p160 = por %p158, %p159
      %s162 = sadd.s32 %s161, 1
      %p165 = scmp.eq.s32.totalorder %s22, 1
      %p166 = scmp.ne.s32.totalorder %s161, %s163
      %p167 = scmp.eq.s32.totalorder %s22, 0
      %p168 = por %p166, %p167
      %p169 = scmp.ne.s32.totalorder %s161, %s163
      %p170 = scmp.eq.s32.totalorder %s27, 1
      %p171 = por %p169, %p170
      %p172 = scmp.ne.s32.totalorder %s163, %s164
      %p173 = scmp.eq.s32.totalorder %s27, 0
      %p174 = por %p172, %p173
      %p175 = scmp.ne.s32.totalorder %s163, %s164
      %p176 = scmp.eq.s32.totalorder %s28, 1
      %p177 = por %p175, %p176
      %p179 = scmp.ne.s32.totalorder %s164, %s178
      %p180 = scmp.eq.s32.totalorder %s28, 0
      %p181 = por %p179, %p180
      %s183 = sadd.s32 %s182, 1
      %p186 = scmp.eq.s32.totalorder %s22, 1
      %p187 = scmp.ne.s32.totalorder %s182, %s184
      %p188 = scmp.eq.s32.totalorder %s22, 0
      %p189 = por %p187, %p188
      %p190 = scmp.ne.s32.totalorder %s182, %s184
      %p191 = scmp.eq.s32.totalorder %s27, 1
      %p192 = por %p190, %p191
      %p193 = scmp.ne.s32.totalorder %s184, %s185
      %p194 = scmp.eq.s32.totalorder %s27, 0
      %p195 = por %p193, %p194
      %p196 = scmp.ne.s32.totalorder %s184, %s185
      %p197 = scmp.eq.s32.totalorder %s28, 1
      %p198 = por %p196, %p197
      %p200 = scmp.ne.s32.totalorder %s185, %s199
      %p201 = scmp.eq.s32.totalorder %s28, 0
      %p202 = por %p200, %p201
      %s204 = sadd.s32 %s203, 1
      %p207 = scmp.eq.s32.totalorder %s22, 1
      %p208 = scmp.ne.s32.totalorder %s203, %s205
      %p209 = scmp.eq.s32.totalorder %s22, 0
      %p210 = por %p208, %p209
      %p211 = scmp.ne.s32.totalorder %s203, %s205
      %p212 = scmp.eq.s32.totalorder %s27, 1
      %p213 = por %p211, %p212
      %p214 = scmp.ne.s32.totalorder %s205, %s206
      %p215 = scmp.eq.s32.totalorder %s27, 0
      %p216 = por %p214, %p215
      %p217 = scmp.ne.s32.totalorder %s205, %s206
      %p218 = scmp.eq.s32.totalorder %s28, 1
      %p219 = por %p217, %p218
      %p221 = scmp.ne.s32.totalorder %s206, %s220
      %p222 = scmp.eq.s32.totalorder %s28, 0
      %p223 = por %p221, %p222
      %s225 = sadd.s32 %s224, 1
      %p228 = scmp.eq.s32.totalorder %s22, 1
      %p229 = scmp.ne.s32.totalorder %s224, %s226
      %p230 = scmp.eq.s32.totalorder %s22, 0
      %p231 = por %p229, %p230
      %p232 = scmp.ne.s32.totalorder %s224, %s226
      %p233 = scmp.eq.s32.totalorder %s27, 1
      %p234 = por %p232, %p233
      %p235 = scmp.ne.s32.totalorder %s226, %s227
      %p236 = scmp.eq.s32.totalorder %s27, 0
      %p237 = por %p235, %p236
      %p238 = scmp.ne.s32.totalorder %s226, %s227
      %p239 = scmp.eq.s32.totalorder %s28, 1
      %p240 = por %p238, %p239
      %p242 = scmp.ne.s32.totalorder %s227, %s241
      %p243 = scmp.eq.s32.totalorder %s28, 0
      %p244 = por %p242, %p243
      %s246 = sadd.s32 %s245, 1
      %p249 = scmp.eq.s32.totalorder %s22, 1
      %p250 = scmp.ne.s32.totalorder %s245, %s247
      %p251 = scmp.eq.s32.totalorder %s22, 0
      %p252 = por %p250, %p251
      %p253 = scmp.ne.s32.totalorder %s245, %s247
      %p254 = scmp.eq.s32.totalorder %s27, 1
      %p255 = por %p253, %p254
      %p256 = scmp.ne.s32.totalorder %s247, %s248
      %p257 = scmp.eq.s32.totalorder %s27, 0
      %p258 = por %p256, %p257
      %p259 = scmp.ne.s32.totalorder %s247, %s248
      %p260 = scmp.eq.s32.totalorder %s28, 1
      %p261 = por %p259, %p260
      %p263 = scmp.ne.s32.totalorder %s248, %s262
      %p264 = scmp.eq.s32.totalorder %s28, 0
      %p265 = por %p263, %p264
      %s266 = ssub.s32 %s22, %s29
      %p267 = scmp.eq.s32.totalorder %s266, 0
      %s269 = sadd.s32 %s268, 1
      %s270 = scalar_select %p267, %s268, %s269
      %p273 = pneg %p267
      %p274 = scmp.eq.s32.totalorder %s22, 1
      %p275 = por %p273, %p274
      %p276 = scmp.ne.s32.totalorder %s268, %s271
      %p277 = scmp.eq.s32.totalorder %s22, 0
      %p278 = por %p276, %p277
      %p279 = scmp.ne.s32.totalorder %s268, %s271
      %p280 = scmp.eq.s32.totalorder %s27, 1
      %p281 = por %p279, %p280
      %p282 = scmp.ne.s32.totalorder %s271, %s272
      %p283 = scmp.eq.s32.totalorder %s27, 0
      %p284 = por %p282, %p283
      %p285 = scmp.ne.s32.totalorder %s271, %s272
      %p286 = scmp.eq.s32.totalorder %s28, 1
      %p287 = por %p285, %p286
      %p289 = scmp.ne.s32.totalorder %s272, %s288
      %p290 = scmp.eq.s32.totalorder %s28, 0
      %p291 = por %p289, %p290
      %p292 = scmp.le.s32.totalorder 1, %s22
      %p293 = scmp.lt.s32.totalorder %s22, 3
      %p294 = pnand %p292, %p293
      %p295 = pneg %p294
      // Predicated region
      $region9: #{tpu_custom_call.1} parent=5 // pred_check
        _
      $region10: #{tpu_custom_call.1} parent=5 // pred_check_branch
        %297 = sbr.rel (%p294) target = $region12
      $region11: #{tpu_custom_call.1} parent=5 // pred_region
        %s298 = ssub.s32 %s22, 1
        // Predicated region
        $region13: #{tpu_custom_call.1} parent=11 // pred_check
          %p299 = pneg %p69
        $region14: #{tpu_custom_call.1} parent=11 // pred_check_branch
          %301 = sbr.rel (%p299) target = $region16
        $region15: #{tpu_custom_call.1} parent=11 // pred_region
          %s303 = ssub.s32 24576, 24576
          %304 = vsyncadd [#allocation4], %s303
          %s305 = sshll.u32 [#allocation3], 4
          %s306 = int_to_ptr.vmem [resolvable:$true] %s305
          %311 = dma.hbm_to_vmem [thread:$0]  %s1, 24576, %s306, [#allocation4], 256, 256, 16
        $region16: #{tpu_custom_call.1} parent=11 // pred_fallthru
          _
        // Predicated region
        $region17: #{tpu_custom_call.1} parent=11 // pred_check
          %p312 = pneg %p90
        $region18: #{tpu_custom_call.1} parent=11 // pred_check_branch
          %314 = sbr.rel (%p312) target = $region20
        $region19: #{tpu_custom_call.1} parent=11 // pred_region
          _
        $region20: #{tpu_custom_call.1} parent=11 // pred_fallthru
          _
        // Predicated region
        $region21: #{tpu_custom_call.1} parent=11 // pred_check
          %p315 = pneg %p111
        $region22: #{tpu_custom_call.1} parent=11 // pred_check_branch
          %317 = sbr.rel (%p315) target = $region24
        $region23: #{tpu_custom_call.1} parent=11 // pred_region
          _
        $region24: #{tpu_custom_call.1} parent=11 // pred_fallthru
          _
        // Predicated region
        $region25: #{tpu_custom_call.1} parent=11 // pred_check
          %p318 = pneg %p132
        $region26: #{tpu_custom_call.1} parent=11 // pred_check_branch
          %320 = sbr.rel (%p318) target = $region28
        $region27: #{tpu_custom_call.1} parent=11 // pred_region
          _
        $region28: #{tpu_custom_call.1} parent=11 // pred_fallthru
          _
        // Predicated region
        $region29: #{tpu_custom_call.1} parent=11 // pred_check
          %p321 = pneg %p153
        $region30: #{tpu_custom_call.1} parent=11 // pred_check_branch
          %323 = sbr.rel (%p321) target = $region32
        $region31: #{tpu_custom_call.1} parent=11 // pred_region
          %s325 = ssub.s32 24576, 24576
          %326 = vsyncadd [#allocation7], %s325
          %s327 = sshll.u32 [#allocation6], 4
          %s328 = int_to_ptr.vmem [resolvable:$true] %s327
          %333 = dma.hbm_to_vmem [thread:$0]  %s5, 24576, %s328, [#allocation7], 256, 256, 16
        $region32: #{tpu_custom_call.1} parent=11 // pred_fallthru
          _
        // Predicated region
        $region33: #{tpu_custom_call.1} parent=11 // pred_check
          %p334 = pneg %p174
        $region34: #{tpu_custom_call.1} parent=11 // pred_check_branch
          %336 = sbr.rel (%p334) target = $region36
        $region35: #{tpu_custom_call.1} parent=11 // pred_region
          _
        $region36: #{tpu_custom_call.1} parent=11 // pred_fallthru
          _
        // Predicated region
        $region37: #{tpu_custom_call.1} parent=11 // pred_check
          %p337 = pneg %p195
        $region38: #{tpu_custom_call.1} parent=11 // pred_check_branch
          %339 = sbr.rel (%p337) target = $region40
        $region39: #{tpu_custom_call.1} parent=11 // pred_region
          _
        $region40: #{tpu_custom_call.1} parent=11 // pred_fallthru
          _
        // Predicated region
        $region41: #{tpu_custom_call.1} parent=11 // pred_check
          %p340 = pneg %p216
        $region42: #{tpu_custom_call.1} parent=11 // pred_check_branch
          %342 = sbr.rel (%p340) target = $region44
        $region43: #{tpu_custom_call.1} parent=11 // pred_region
          _
        $region44: #{tpu_custom_call.1} parent=11 // pred_fallthru
          _
        // Predicated region
        $region45: #{tpu_custom_call.1} parent=11 // pred_check
          %p343 = pneg %p237
        $region46: #{tpu_custom_call.1} parent=11 // pred_check_branch
          %345 = sbr.rel (%p343) target = $region48
        $region47: #{tpu_custom_call.1} parent=11 // pred_region
          _
        $region48: #{tpu_custom_call.1} parent=11 // pred_fallthru
          _
        // Predicated region
        $region49: #{tpu_custom_call.1} parent=11 // pred_check
          %p346 = pneg %p258
        $region50: #{tpu_custom_call.1} parent=11 // pred_check_branch
          %348 = sbr.rel (%p346) target = $region52
        $region51: #{tpu_custom_call.1} parent=11 // pred_region
          _
        $region52: #{tpu_custom_call.1} parent=11 // pred_fallthru
          _
      $region12: #{tpu_custom_call.1} parent=5 // pred_fallthru
        _
      %p349 = scmp.lt.s32.totalorder %s22, 2
      // Predicated region
      $region53: #{tpu_custom_call.1} parent=5 // pred_check
        %p350 = pneg %p349
      $region54: #{tpu_custom_call.1} parent=5 // pred_check_branch
        %352 = sbr.rel (%p350) target = $region56
      $region55: #{tpu_custom_call.1} parent=5 // pred_region
        // Predicated region
        $region57: #{tpu_custom_call.1} parent=55 // pred_check
          %p353 = pneg %p42
        $region58: #{tpu_custom_call.1} parent=55 // pred_check_branch
          %355 = sbr.rel (%p353) target = $region60
        $region59: #{tpu_custom_call.1} parent=55 // pred_region
          %p356 = scmp.lt.s32.totalorder %s22, 1
          %s357 = scalar_select %p356, %s22, 1
          %s358 = smul.addr %s357, 4
          %s359 = smul.addr %s358, 8
          %s360 = scalar_lea.vmem %s0, %s359
        $region60: #{tpu_custom_call.1} parent=55 // pred_fallthru
          _
      $region56: #{tpu_custom_call.1} parent=5 // pred_fallthru
        _
      %p361 = scmp.le.s32.totalorder 1, %s22
      %p362 = scmp.lt.s32.totalorder %s22, 3
      %p363 = pnand %p361, %p362
      %p364 = pneg %p363
      // Predicated region
      $region61: #{tpu_custom_call.1} parent=5 // pred_check
        _
      $region62: #{tpu_custom_call.1} parent=5 // pred_check_branch
        %366 = sbr.rel (%p363) target = $region64
      $region63: #{tpu_custom_call.1} parent=5 // pred_region
        %s367 = ssub.s32 %s22, 1
        // Predicated region
        $region65: #{tpu_custom_call.1} parent=63 // pred_check
          %p368 = pneg %p69
        $region66: #{tpu_custom_call.1} parent=63 // pred_check_branch
          %370 = sbr.rel (%p368) target = $region68
        $region67: #{tpu_custom_call.1} parent=63 // pred_region
          %371 = dma.done [#allocation4], 24576
        $region68: #{tpu_custom_call.1} parent=63 // pred_fallthru
          _
        // Predicated region
        $region69: #{tpu_custom_call.1} parent=63 // pred_check
          %p372 = pneg %p153
        $region70: #{tpu_custom_call.1} parent=63 // pred_check_branch
          %374 = sbr.rel (%p372) target = $region72
        $region71: #{tpu_custom_call.1} parent=63 // pred_region
          %375 = dma.done [#allocation7], 24576
        $region72: #{tpu_custom_call.1} parent=63 // pred_fallthru
          _
        %p376 = scmp.lt.s32.totalorder %s27, 1
        %s377 = scalar_select %p376, %s27, 1
        %s378 = smul.addr %s377, 4
        %s379 = smul.addr %s378, 8
        %s380 = scalar_lea.vmem %s0, %s379
        %p381 = pneg %p48
        %p382 = pneg %p45
        %p383 = pneg %p69
        %p384 = pneg %p66
        %p385 = pneg %p90
        %p386 = pneg %p87
        %p387 = pneg %p111
        %p388 = pneg %p108
        %p389 = pneg %p132
        %p390 = pneg %p129
        %p391 = pneg %p153
        %p392 = pneg %p150
        %p393 = pneg %p174
        %p394 = pneg %p171
        %p395 = pneg %p195
        %p396 = pneg %p192
        %p397 = pneg %p216
        %p398 = pneg %p213
        %p399 = pneg %p237
        %p400 = pneg %p234
        %p401 = pneg %p258
        %p402 = pneg %p255
        %p403 = pneg %p284
        %p404 = pneg %p281
        %s405 = sand.u32 %s271, 1
        %s406 = scalar_lea.sflag [#allocation5], %s405
        %s407 = sand.u32 %s271, 1
        %s408 = smul.addr %s407, 32
        %s409 = scalar_lea.vmem [#allocation8], %s408
        %p410 = scmp.lt.s32.totalorder %s27, 1
        %s411 = scalar_select %p410, %s27, 1
        %s412 = smul.addr %s411, 4
        %s413 = smul.addr %s412, 8
        %s414 = scalar_lea.vmem %s0, %s413
        %v415 = vlaneseq
        %vm416 = vcmp.ge.s32.totalorder %v415, 0
        %vm417 = vcmp.lt.s32.totalorder %v415, 256
        %vm418 = vmand %vm416, %vm417
        %419 = vst.msk [vmem:[#allocation2] ss:$8 sm:$0x3] %vm418, 0.0
        %420 = vst.msk [vmem:[#allocation2] ss:$8 sm:$0x0] %vm418, 0.0
        %s421 = scalar_lea.vmem [#allocation2], 33
        %422 = vst.msk [vmem:[%s421] ss:$8 sm:$0x3] %vm418, 0.0
        %423 = vst.msk [vmem:[%s421] ss:$8 sm:$0x0] %vm418, 0.0
        %v424 = vld [vmem:[%s9] sm:$0xff]
        %v425 = vld [vmem:[%s9 + $0x8] sm:$0xff]
        %v426 = vld [vmem:[%s9 + $0x10] sm:$0xff]
        %v427 = vld [vmem:[%s9 + $0x18] sm:$0xff]
        %v428 = vld [vmem:[%s9 + $0x20] sm:$0xff]
        %v429 = vld [vmem:[%s9 + $0x28] sm:$0xff]
        %v430 = vld [vmem:[%s9 + $0x30] sm:$0xff]
        %v431 = vld [vmem:[%s9 + $0x38] sm:$0xff]
        %v432 = vld [vmem:[%s9 + $0x40] sm:$0xff]
        %v433 = vld [vmem:[%s9 + $0x48] sm:$0xff]
        %v434 = vld [vmem:[%s9 + $0x50] sm:$0xff]
        %v435 = vld [vmem:[%s9 + $0x58] sm:$0xff]
        %v436 = vld [vmem:[%s9 + $0x60] sm:$0xff]
        %v437 = vld [vmem:[%s9 + $0x68] sm:$0xff]
        %v438 = vld [vmem:[%s9 + $0x70] sm:$0xff]
        %v439 = vld [vmem:[%s9 + $0x78] sm:$0xff]
        %v440 = vld [vmem:[%s9 + $0x80] sm:$0xff]
        %v441 = vld [vmem:[%s9 + $0x88] sm:$0xff]
        %v442 = vld [vmem:[%s9 + $0x90] sm:$0xff]
        %v443 = vld [vmem:[%s9 + $0x98] sm:$0xff]
        %v444 = vld [vmem:[%s9 + $0xa0] sm:$0xff]
        %v445 = vld [vmem:[%s9 + $0xa8] sm:$0xff]
        %v446 = vld [vmem:[%s9 + $0xb0] sm:$0xff]
        %v447 = vld [vmem:[%s9 + $0xb8] sm:$0xff]
        %v448 = vld [vmem:[%s9 + $0xc0] sm:$0xff]
        %v449 = vld [vmem:[%s9 + $0xc8] sm:$0xff]
        %v450 = vld [vmem:[%s9 + $0xd0] sm:$0xff]
        %v451 = vld [vmem:[%s9 + $0xd8] sm:$0xff]
        %v452 = vld [vmem:[%s9 + $0xe0] sm:$0xff]
        %v453 = vld [vmem:[%s9 + $0xe8] sm:$0xff]
        %v454 = vld [vmem:[%s9 + $0xf0] sm:$0xff]
        %v455 = vld [vmem:[%s9 + $0xf8] sm:$0xff]
        %v456 = vld [vmem:[%s10] sm:$0xf]
        %v457 = vld [vmem:[%s414] sm:$0xff]
        %v458 = vld [vmem:[%s414 + $0x8] sm:$0xff]
        %v459 = vld [vmem:[%s414 + $0x10] sm:$0xff]
        %v460 = vld [vmem:[%s414 + $0x18] sm:$0xff]
        %vm465 = vcmask 1040384
        %v466 = vrot.slane %v457, 7
        %v467 = vrot.slane %v458, 7
        %v468 = vrot.slane %v459, 7
        %v469 = vsel %vm465, %v466, %v468
        %v470 = vrot.slane %v460, 7
        %v471 = vsel %vm465, %v467, %v470
        %478 = vst [vmem:[#allocation2] sm:$0xfe] %v466
        %479 = vst [vmem:[#allocation2 + $0x8] sm:$0xfe] %v467
        %480 = vst [vmem:[#allocation2 + $0x10] sm:$0xff] %v469
        %481 = vst [vmem:[#allocation2 + $0x18] sm:$0xff] %v471
        %482 = vst [vmem:[#allocation2 + $0x20] sm:$0x1] %v468
        %483 = vst [vmem:[#allocation2 + $0x28] sm:$0x1] %v470
        %v484 = vld [vmem:[#allocation2] sm:$0xff]
        %v485 = vld [vmem:[#allocation2 + $0x8] sm:$0xff]
        %v486 = vld [vmem:[#allocation2 + $0x10] sm:$0xff]
        %v487 = vld [vmem:[#allocation2 + $0x18] sm:$0xff]
        %v488 = vld [vmem:[#allocation3] sm:$0xff]
        %v489 = vld [vmem:[#allocation3 + $0x8] sm:$0xff]
        %v490 = vld [vmem:[#allocation3 + $0x10] sm:$0xff]
        %v491 = vld [vmem:[#allocation3 + $0x18] sm:$0xff]
        %v492 = vld [vmem:[#allocation3 + $0x20] sm:$0xff]
        %v493 = vld [vmem:[#allocation3 + $0x28] sm:$0xff]
        %v494 = vld [vmem:[#allocation3 + $0x30] sm:$0xff]
        %v495 = vld [vmem:[#allocation3 + $0x38] sm:$0xff]
        %v496 = vld [vmem:[#allocation3 + $0x40] sm:$0xff]
        %v497 = vld [vmem:[#allocation3 + $0x48] sm:$0xff]
        %v498 = vld [vmem:[#allocation3 + $0x50] sm:$0xff]
        %v499 = vld [vmem:[#allocation3 + $0x58] sm:$0xff]
        %v500 = vld [vmem:[#allocation3 + $0x60] sm:$0xff]
        %v501 = vld [vmem:[#allocation3 + $0x68] sm:$0xff]
        %v502 = vld [vmem:[#allocation3 + $0x70] sm:$0xff]
        %v503 = vld [vmem:[#allocation3 + $0x78] sm:$0xff]
        %v504 = vld [vmem:[#allocation3 + $0x80] sm:$0xff]
        %v505 = vld [vmem:[#allocation3 + $0x88] sm:$0xff]
        %v506 = vld [vmem:[#allocation3 + $0x90] sm:$0xff]
        %v507 = vld [vmem:[#allocation3 + $0x98] sm:$0xff]
        %v508 = vld [vmem:[#allocation3 + $0xa0] sm:$0xff]
        %v509 = vld [vmem:[#allocation3 + $0xa8] sm:$0xff]
        %v510 = vld [vmem:[#allocation3 + $0xb0] sm:$0xff]
        %v511 = vld [vmem:[#allocation3 + $0xb8] sm:$0xff]
        %v512 = vld [vmem:[#allocation3 + $0xc0] sm:$0xff]
        %v513 = vld [vmem:[#allocation3 + $0xc8] sm:$0xff]
        %v514 = vld [vmem:[#allocation3 + $0xd0] sm:$0xff]
        %v515 = vld [vmem:[#allocation3 + $0xd8] sm:$0xff]
        %v516 = vld [vmem:[#allocation3 + $0xe0] sm:$0xff]
        %v517 = vld [vmem:[#allocation3 + $0xe8] sm:$0xff]
        %v518 = vld [vmem:[#allocation3 + $0xf0] sm:$0xff]
        %v519 = vld [vmem:[#allocation3 + $0xf8] sm:$0xff]
        %v520 = vld [vmem:[#allocation3 + $0x100] sm:$0xff]
        %v521 = vld [vmem:[#allocation3 + $0x108] sm:$0xff]
        %v522 = vld [vmem:[#allocation3 + $0x110] sm:$0xff]
        %v523 = vld [vmem:[#allocation3 + $0x118] sm:$0xff]
        %v524 = vld [vmem:[#allocation3 + $0x120] sm:$0xff]
        %v525 = vld [vmem:[#allocation3 + $0x128] sm:$0xff]
        %v526 = vld [vmem:[#allocation3 + $0x130] sm:$0xff]
        %v527 = vld [vmem:[#allocation3 + $0x138] sm:$0xff]
        %v528 = vld [vmem:[#allocation3 + $0x140] sm:$0xff]
        %v529 = vld [vmem:[#allocation3 + $0x148] sm:$0xff]
        %v530 = vld [vmem:[#allocation3 + $0x150] sm:$0xff]
        %v531 = vld [vmem:[#allocation3 + $0x158] sm:$0xff]
        %v532 = vld [vmem:[#allocation3 + $0x160] sm:$0xff]
        %v533 = vld [vmem:[#allocation3 + $0x168] sm:$0xff]
        %v534 = vld [vmem:[#allocation3 + $0x170] sm:$0xff]
        %v535 = vld [vmem:[#allocation3 + $0x178] sm:$0xff]
        %v536 = vld [vmem:[#allocation3 + $0x180] sm:$0xff]
        %v537 = vld [vmem:[#allocation3 + $0x188] sm:$0xff]
        %v538 = vld [vmem:[#allocation3 + $0x190] sm:$0xff]
        %v539 = vld [vmem:[#allocation3 + $0x198] sm:$0xff]
        %v540 = vld [vmem:[#allocation3 + $0x1a0] sm:$0xff]
        %v541 = vld [vmem:[#allocation3 + $0x1a8] sm:$0xff]
        %v542 = vld [vmem:[#allocation3 + $0x1b0] sm:$0xff]
        %v543 = vld [vmem:[#allocation3 + $0x1b8] sm:$0xff]
        %v544 = vld [vmem:[#allocation3 + $0x1c0] sm:$0xff]
        %v545 = vld [vmem:[#allocation3 + $0x1c8] sm:$0xff]
        %v546 = vld [vmem:[#allocation3 + $0x1d0] sm:$0xff]
        %v547 = vld [vmem:[#allocation3 + $0x1d8] sm:$0xff]
        %v548 = vld [vmem:[#allocation3 + $0x1e0] sm:$0xff]
        %v549 = vld [vmem:[#allocation3 + $0x1e8] sm:$0xff]
        %v550 = vld [vmem:[#allocation3 + $0x1f0] sm:$0xff]
        %v551 = vld [vmem:[#allocation3 + $0x1f8] sm:$0xff]
        %v552 = vld [vmem:[#allocation2] sm:$0xfe]
        %v553 = vld [vmem:[#allocation2 + $0x8] sm:$0xfe]
        %v554 = vld [vmem:[#allocation2 + $0x20] sm:$0x1]
        %v555 = vld [vmem:[#allocation2 + $0x28] sm:$0x1]
        %s556 = scalar_lea.vmem [#allocation3], 512
        %v557 = vld [vmem:[%s556] sm:$0xff]
        %v558 = vld [vmem:[%s556 + $0x8] sm:$0xff]
        %v559 = vld [vmem:[%s556 + $0x10] sm:$0xff]
        %v560 = vld [vmem:[%s556 + $0x18] sm:$0xff]
        %v561 = vld [vmem:[%s556 + $0x20] sm:$0xff]
        %v562 = vld [vmem:[%s556 + $0x28] sm:$0xff]
        %v563 = vld [vmem:[%s556 + $0x30] sm:$0xff]
        %v564 = vld [vmem:[%s556 + $0x38] sm:$0xff]
        %v565 = vld [vmem:[%s556 + $0x40] sm:$0xff]
        %v566 = vld [vmem:[%s556 + $0x48] sm:$0xff]
        %v567 = vld [vmem:[%s556 + $0x50] sm:$0xff]
        %v568 = vld [vmem:[%s556 + $0x58] sm:$0xff]
        %v569 = vld [vmem:[%s556 + $0x60] sm:$0xff]
        %v570 = vld [vmem:[%s556 + $0x68] sm:$0xff]
        %v571 = vld [vmem:[%s556 + $0x70] sm:$0xff]
        %v572 = vld [vmem:[%s556 + $0x78] sm:$0xff]
        %v573 = vld [vmem:[%s556 + $0x80] sm:$0xff]
        %v574 = vld [vmem:[%s556 + $0x88] sm:$0xff]
        %v575 = vld [vmem:[%s556 + $0x90] sm:$0xff]
        %v576 = vld [vmem:[%s556 + $0x98] sm:$0xff]
        %v577 = vld [vmem:[%s556 + $0xa0] sm:$0xff]
        %v578 = vld [vmem:[%s556 + $0xa8] sm:$0xff]
        %v579 = vld [vmem:[%s556 + $0xb0] sm:$0xff]
        %v580 = vld [vmem:[%s556 + $0xb8] sm:$0xff]
        %v581 = vld [vmem:[%s556 + $0xc0] sm:$0xff]
        %v582 = vld [vmem:[%s556 + $0xc8] sm:$0xff]
        %v583 = vld [vmem:[%s556 + $0xd0] sm:$0xff]
        %v584 = vld [vmem:[%s556 + $0xd8] sm:$0xff]
        %v585 = vld [vmem:[%s556 + $0xe0] sm:$0xff]
        %v586 = vld [vmem:[%s556 + $0xe8] sm:$0xff]
        %v587 = vld [vmem:[%s556 + $0xf0] sm:$0xff]
        %v588 = vld [vmem:[%s556 + $0xf8] sm:$0xff]
        %v589 = vld [vmem:[%s556 + $0x100] sm:$0xff]
        %v590 = vld [vmem:[%s556 + $0x108] sm:$0xff]
        %v591 = vld [vmem:[%s556 + $0x110] sm:$0xff]
        %v592 = vld [vmem:[%s556 + $0x118] sm:$0xff]
        %v593 = vld [vmem:[%s556 + $0x120] sm:$0xff]
        %v594 = vld [vmem:[%s556 + $0x128] sm:$0xff]
        %v595 = vld [vmem:[%s556 + $0x130] sm:$0xff]
        %v596 = vld [vmem:[%s556 + $0x138] sm:$0xff]
        %v597 = vld [vmem:[%s556 + $0x140] sm:$0xff]
        %v598 = vld [vmem:[%s556 + $0x148] sm:$0xff]
        %v599 = vld [vmem:[%s556 + $0x150] sm:$0xff]
        %v600 = vld [vmem:[%s556 + $0x158] sm:$0xff]
        %v601 = vld [vmem:[%s556 + $0x160] sm:$0xff]
        %v602 = vld [vmem:[%s556 + $0x168] sm:$0xff]
        %v603 = vld [vmem:[%s556 + $0x170] sm:$0xff]
        %v604 = vld [vmem:[%s556 + $0x178] sm:$0xff]
        %v605 = vld [vmem:[%s556 + $0x180] sm:$0xff]
        %v606 = vld [vmem:[%s556 + $0x188] sm:$0xff]
        %v607 = vld [vmem:[%s556 + $0x190] sm:$0xff]
        %v608 = vld [vmem:[%s556 + $0x198] sm:$0xff]
        %v609 = vld [vmem:[%s556 + $0x1a0] sm:$0xff]
        %v610 = vld [vmem:[%s556 + $0x1a8] sm:$0xff]
        %v611 = vld [vmem:[%s556 + $0x1b0] sm:$0xff]
        %v612 = vld [vmem:[%s556 + $0x1b8] sm:$0xff]
        %v613 = vld [vmem:[%s556 + $0x1c0] sm:$0xff]
        %v614 = vld [vmem:[%s556 + $0x1c8] sm:$0xff]
        %v615 = vld [vmem:[%s556 + $0x1d0] sm:$0xff]
        %v616 = vld [vmem:[%s556 + $0x1d8] sm:$0xff]
        %v617 = vld [vmem:[%s556 + $0x1e0] sm:$0xff]
        %v618 = vld [vmem:[%s556 + $0x1e8] sm:$0xff]
        %v619 = vld [vmem:[%s556 + $0x1f0] sm:$0xff]
        %v620 = vld [vmem:[%s556 + $0x1f8] sm:$0xff]
        %vm627 = vcmask 1046528
        %v628 = vrot.slane %v552, 1
        %v629 = vrot.slane %v486, 1
        %v630 = vsel %vm627, %v628, %v629
        %v631 = vrot.slane %v553, 1
        %v632 = vrot.slane %v487, 1
        %v633 = vsel %vm627, %v631, %v632
        %v634 = vrot.slane %v554, 1
        %v635 = vsel %vm627, %v629, %v634
        %v636 = vrot.slane %v555, 1
        %v637 = vsel %vm627, %v632, %v636
        %642 = vmatprep.subr.mxu0 %v588
        %643 = vmatpush1.msra.mxu0 %v587
        %644 = vmatprep.subr.mxu0 %v586
        %645 = vmatpush1.msra.mxu0 %v585
        %646 = vmatprep.subr.mxu0 %v584
        %647 = vmatpush1.msra.mxu0 %v583
        %648 = vmatprep.subr.mxu0 %v582
        %649 = vmatpush1.msra.mxu0 %v581
        %650 = vmatprep.subr.mxu0 %v580
        %651 = vmatpush1.msra.mxu0 %v579
        %652 = vmatprep.subr.mxu0 %v578
        %653 = vmatpush1.msra.mxu0 %v577
        %654 = vmatprep.subr.mxu0 %v576
        %655 = vmatpush1.msra.mxu0 %v575
        %656 = vmatprep.subr.mxu0 %v574
        %657 = vmatpush1.msra.mxu0 %v573
        %658 = vmatprep.subr.mxu0 %v572
        %659 = vmatpush1.msra.mxu0 %v571
        %660 = vmatprep.subr.mxu0 %v570
        %661 = vmatpush1.msra.mxu0 %v569
        %662 = vmatprep.subr.mxu0 %v568
        %663 = vmatpush1.msra.mxu0 %v567
        %664 = vmatprep.subr.mxu0 %v566
        %665 = vmatpush1.msra.mxu0 %v565
        %666 = vmatprep.subr.mxu0 %v564
        %667 = vmatpush1.msra.mxu0 %v563
        %668 = vmatprep.subr.mxu0 %v562
        %669 = vmatpush1.msra.mxu0 %v561
        %670 = vmatprep.subr.mxu0 %v560
        %671 = vmatpush1.msra.mxu0 %v559
        %672 = vmatprep.subr.mxu0 %v558
        %673 = vmatpush1.msra.mxu0 %v557
        %674 = vmatprep.subr.mxu0 %v620
        %675 = vmatpush2.msra.mxu0 %v619
        %676 = vmatprep.subr.mxu0 %v618
        %677 = vmatpush2.msra.mxu0 %v617
        %678 = vmatprep.subr.mxu0 %v616
        %679 = vmatpush2.msra.mxu0 %v615
        %680 = vmatprep.subr.mxu0 %v614
        %681 = vmatpush2.msra.mxu0 %v613
        %682 = vmatprep.subr.mxu0 %v612
        %683 = vmatpush2.msra.mxu0 %v611
        %684 = vmatprep.subr.mxu0 %v610
        %685 = vmatpush2.msra.mxu0 %v609
        %686 = vmatprep.subr.mxu0 %v608
        %687 = vmatpush2.msra.mxu0 %v607
        %688 = vmatprep.subr.mxu0 %v606
        %689 = vmatpush2.msra.mxu0 %v605
        %690 = vmatprep.subr.mxu0 %v604
        %691 = vmatpush2.msra.mxu0 %v603
        %692 = vmatprep.subr.mxu0 %v602
        %693 = vmatpush2.msra.mxu0 %v601
        %694 = vmatprep.subr.mxu0 %v600
        %695 = vmatpush2.msra.mxu0 %v599
        %696 = vmatprep.subr.mxu0 %v598
        %697 = vmatpush2.msra.mxu0 %v597
        %698 = vmatprep.subr.mxu0 %v596
        %699 = vmatpush2.msra.mxu0 %v595
        %700 = vmatprep.subr.mxu0 %v594
        %701 = vmatpush2.msra.mxu0 %v593
        %702 = vmatprep.subr.mxu0 %v592
        %703 = vmatpush2.msra.mxu0 %v591
        %704 = vmatprep.subr.mxu0 %v590
        %705 = vmatpush2.msra.mxu0 %v589
        %706 = vmatprep.mubr.f32.mxu0 %v633
        %707 = vmatmul.mubr.f32.gmra.mxu0 %v630
        %v708 = vpop.f32.mrf.mxu0
        %v709 = vadd.f32 0.0, %v708
        %v710 = vpop.f32.mrf.mxu0
        %v711 = vadd.f32 0.0, %v710
        %712 = vmatprep.mubr.f32.mxu0 %v637
        %713 = vmatmul.mubr.f32.gmra.mxu0 %v635
        %v714 = vpop.f32.mrf.mxu0
        %v715 = vadd.f32 0.0, %v714
        %v716 = vpop.f32.mrf.mxu0
        %v717 = vadd.f32 0.0, %v716
        %718 = vdwg.mxu0
        %719 = vmatprep.subr.mxu0 %v519
        %720 = vmatpush1.msra.mxu0 %v518
        %721 = vmatprep.subr.mxu0 %v517
        %722 = vmatpush1.msra.mxu0 %v516
        %723 = vmatprep.subr.mxu0 %v515
        %724 = vmatpush1.msra.mxu0 %v514
        %725 = vmatprep.subr.mxu0 %v513
        %726 = vmatpush1.msra.mxu0 %v512
        %727 = vmatprep.subr.mxu0 %v511
        %728 = vmatpush1.msra.mxu0 %v510
        %729 = vmatprep.subr.mxu0 %v509
        %730 = vmatpush1.msra.mxu0 %v508
        %731 = vmatprep.subr.mxu0 %v507
        %732 = vmatpush1.msra.mxu0 %v506
        %733 = vmatprep.subr.mxu0 %v505
        %734 = vmatpush1.msra.mxu0 %v504
        %735 = vmatprep.subr.mxu0 %v503
        %736 = vmatpush1.msra.mxu0 %v502
        %737 = vmatprep.subr.mxu0 %v501
        %738 = vmatpush1.msra.mxu0 %v500
        %739 = vmatprep.subr.mxu0 %v499
        %740 = vmatpush1.msra.mxu0 %v498
        %741 = vmatprep.subr.mxu0 %v497
        %742 = vmatpush1.msra.mxu0 %v496
        %743 = vmatprep.subr.mxu0 %v495
        %744 = vmatpush1.msra.mxu0 %v494
        %745 = vmatprep.subr.mxu0 %v493
        %746 = vmatpush1.msra.mxu0 %v492
        %747 = vmatprep.subr.mxu0 %v491
        %748 = vmatpush1.msra.mxu0 %v490
        %749 = vmatprep.subr.mxu0 %v489
        %750 = vmatpush1.msra.mxu0 %v488
        %751 = vmatprep.subr.mxu0 %v551
        %752 = vmatpush2.msra.mxu0 %v550
        %753 = vmatprep.subr.mxu0 %v549
        %754 = vmatpush2.msra.mxu0 %v548
        %755 = vmatprep.subr.mxu0 %v547
        %756 = vmatpush2.msra.mxu0 %v546
        %757 = vmatprep.subr.mxu0 %v545
        %758 = vmatpush2.msra.mxu0 %v544
        %759 = vmatprep.subr.mxu0 %v543
        %760 = vmatpush2.msra.mxu0 %v542
        %761 = vmatprep.subr.mxu0 %v541
        %762 = vmatpush2.msra.mxu0 %v540
        %763 = vmatprep.subr.mxu0 %v539
        %764 = vmatpush2.msra.mxu0 %v538
        %765 = vmatprep.subr.mxu0 %v537
        %766 = vmatpush2.msra.mxu0 %v536
        %767 = vmatprep.subr.mxu0 %v535
        %768 = vmatpush2.msra.mxu0 %v534
        %769 = vmatprep.subr.mxu0 %v533
        %770 = vmatpush2.msra.mxu0 %v532
        %771 = vmatprep.subr.mxu0 %v531
        %772 = vmatpush2.msra.mxu0 %v530
        %773 = vmatprep.subr.mxu0 %v529
        %774 = vmatpush2.msra.mxu0 %v528
        %775 = vmatprep.subr.mxu0 %v527
        %776 = vmatpush2.msra.mxu0 %v526
        %777 = vmatprep.subr.mxu0 %v525
        %778 = vmatpush2.msra.mxu0 %v524
        %779 = vmatprep.subr.mxu0 %v523
        %780 = vmatpush2.msra.mxu0 %v522
        %781 = vmatprep.subr.mxu0 %v521
        %782 = vmatpush2.msra.mxu0 %v520
        %783 = vmatprep.mubr.f32.mxu0 %v485
        %784 = vmatmul.mubr.f32.gmra.mxu0 %v484
        %v785 = vpop.f32.mrf.mxu0
        %v786 = vadd.f32 %v709, %v785
        %v787 = vpop.f32.mrf.mxu0
        %v788 = vadd.f32 %v711, %v787
        %789 = vmatprep.mubr.f32.mxu0 %v487
        %790 = vmatmul.mubr.f32.gmra.mxu0 %v486
        %v791 = vpop.f32.mrf.mxu0
        %v792 = vadd.f32 %v715, %v791
        %v793 = vpop.f32.mrf.mxu0
        %v794 = vadd.f32 %v717, %v793
        %795 = vdwg.mxu0
        %v796 = vld [vmem:[#allocation2] sm:$0xfc]
        %v797 = vld [vmem:[#allocation2 + $0x8] sm:$0xfc]
        %v798 = vld [vmem:[#allocation2 + $0x20] sm:$0x3]
        %v799 = vld [vmem:[#allocation2 + $0x28] sm:$0x3]
        %s800 = scalar_lea.vmem [#allocation3], 1024
        %v801 = vld [vmem:[%s800] sm:$0xff]
        %v802 = vld [vmem:[%s800 + $0x8] sm:$0xff]
        %v803 = vld [vmem:[%s800 + $0x10] sm:$0xff]
        %v804 = vld [vmem:[%s800 + $0x18] sm:$0xff]
        %v805 = vld [vmem:[%s800 + $0x20] sm:$0xff]
        %v806 = vld [vmem:[%s800 + $0x28] sm:$0xff]
        %v807 = vld [vmem:[%s800 + $0x30] sm:$0xff]
        %v808 = vld [vmem:[%s800 + $0x38] sm:$0xff]
        %v809 = vld [vmem:[%s800 + $0x40] sm:$0xff]
        %v810 = vld [vmem:[%s800 + $0x48] sm:$0xff]
        %v811 = vld [vmem:[%s800 + $0x50] sm:$0xff]
        %v812 = vld [vmem:[%s800 + $0x58] sm:$0xff]
        %v813 = vld [vmem:[%s800 + $0x60] sm:$0xff]
        %v814 = vld [vmem:[%s800 + $0x68] sm:$0xff]
        %v815 = vld [vmem:[%s800 + $0x70] sm:$0xff]
        %v816 = vld [vmem:[%s800 + $0x78] sm:$0xff]
        %v817 = vld [vmem:[%s800 + $0x80] sm:$0xff]
        %v818 = vld [vmem:[%s800 + $0x88] sm:$0xff]
        %v819 = vld [vmem:[%s800 + $0x90] sm:$0xff]
        %v820 = vld [vmem:[%s800 + $0x98] sm:$0xff]
        %v821 = vld [vmem:[%s800 + $0xa0] sm:$0xff]
        %v822 = vld [vmem:[%s800 + $0xa8] sm:$0xff]
        %v823 = vld [vmem:[%s800 + $0xb0] sm:$0xff]
        %v824 = vld [vmem:[%s800 + $0xb8] sm:$0xff]
        %v825 = vld [vmem:[%s800 + $0xc0] sm:$0xff]
        %v826 = vld [vmem:[%s800 + $0xc8] sm:$0xff]
        %v827 = vld [vmem:[%s800 + $0xd0] sm:$0xff]
        %v828 = vld [vmem:[%s800 + $0xd8] sm:$0xff]
        %v829 = vld [vmem:[%s800 + $0xe0] sm:$0xff]
        %v830 = vld [vmem:[%s800 + $0xe8] sm:$0xff]
        %v831 = vld [vmem:[%s800 + $0xf0] sm:$0xff]
        %v832 = vld [vmem:[%s800 + $0xf8] sm:$0xff]
        %v833 = vld [vmem:[%s800 + $0x100] sm:$0xff]
        %v834 = vld [vmem:[%s800 + $0x108] sm:$0xff]
        %v835 = vld [vmem:[%s800 + $0x110] sm:$0xff]
        %v836 = vld [vmem:[%s800 + $0x118] sm:$0xff]
        %v837 = vld [vmem:[%s800 + $0x120] sm:$0xff]
        %v838 = vld [vmem:[%s800 + $0x128] sm:$0xff]
        %v839 = vld [vmem:[%s800 + $0x130] sm:$0xff]
        %v840 = vld [vmem:[%s800 + $0x138] sm:$0xff]
        %v841 = vld [vmem:[%s800 + $0x140] sm:$0xff]
        %v842 = vld [vmem:[%s800 + $0x148] sm:$0xff]
        %v843 = vld [vmem:[%s800 + $0x150] sm:$0xff]
        %v844 = vld [vmem:[%s800 + $0x158] sm:$0xff]
        %v845 = vld [vmem:[%s800 + $0x160] sm:$0xff]
        %v846 = vld [vmem:[%s800 + $0x168] sm:$0xff]
        %v847 = vld [vmem:[%s800 + $0x170] sm:$0xff]
        %v848 = vld [vmem:[%s800 + $0x178] sm:$0xff]
        %v849 = vld [vmem:[%s800 + $0x180] sm:$0xff]
        %v850 = vld [vmem:[%s800 + $0x188] sm:$0xff]
        %v851 = vld [vmem:[%s800 + $0x190] sm:$0xff]
        %v852 = vld [vmem:[%s800 + $0x198] sm:$0xff]
        %v853 = vld [vmem:[%s800 + $0x1a0] sm:$0xff]
        %v854 = vld [vmem:[%s800 + $0x1a8] sm:$0xff]
        %v855 = vld [vmem:[%s800 + $0x1b0] sm:$0xff]
        %v856 = vld [vmem:[%s800 + $0x1b8] sm:$0xff]
        %v857 = vld [vmem:[%s800 + $0x1c0] sm:$0xff]
        %v858 = vld [vmem:[%s800 + $0x1c8] sm:$0xff]
        %v859 = vld [vmem:[%s800 + $0x1d0] sm:$0xff]
        %v860 = vld [vmem:[%s800 + $0x1d8] sm:$0xff]
        %v861 = vld [vmem:[%s800 + $0x1e0] sm:$0xff]
        %v862 = vld [vmem:[%s800 + $0x1e8] sm:$0xff]
        %v863 = vld [vmem:[%s800 + $0x1f0] sm:$0xff]
        %v864 = vld [vmem:[%s800 + $0x1f8] sm:$0xff]
        %vm869 = vcmask 1045504
        %v870 = vrot.slane %v796, 2
        %v871 = vrot.slane %v486, 2
        %v872 = vsel %vm869, %v870, %v871
        %v873 = vrot.slane %v797, 2
        %v874 = vrot.slane %v487, 2
        %v875 = vsel %vm869, %v873, %v874
        %v876 = vrot.slane %v798, 2
        %v877 = vsel %vm869, %v871, %v876
        %v878 = vrot.slane %v799, 2
        %v879 = vsel %vm869, %v874, %v878
        %884 = vmatprep.subr.mxu0 %v832
        %885 = vmatpush1.msra.mxu0 %v831
        %886 = vmatprep.subr.mxu0 %v830
        %887 = vmatpush1.msra.mxu0 %v829
        %888 = vmatprep.subr.mxu0 %v828
        %889 = vmatpush1.msra.mxu0 %v827
        %890 = vmatprep.subr.mxu0 %v826
        %891 = vmatpush1.msra.mxu0 %v825
        %892 = vmatprep.subr.mxu0 %v824
        %893 = vmatpush1.msra.mxu0 %v823
        %894 = vmatprep.subr.mxu0 %v822
        %895 = vmatpush1.msra.mxu0 %v821
        %896 = vmatprep.subr.mxu0 %v820
        %897 = vmatpush1.msra.mxu0 %v819
        %898 = vmatprep.subr.mxu0 %v818
        %899 = vmatpush1.msra.mxu0 %v817
        %900 = vmatprep.subr.mxu0 %v816
        %901 = vmatpush1.msra.mxu0 %v815
        %902 = vmatprep.subr.mxu0 %v814
        %903 = vmatpush1.msra.mxu0 %v813
        %904 = vmatprep.subr.mxu0 %v812
        %905 = vmatpush1.msra.mxu0 %v811
        %906 = vmatprep.subr.mxu0 %v810
        %907 = vmatpush1.msra.mxu0 %v809
        %908 = vmatprep.subr.mxu0 %v808
        %909 = vmatpush1.msra.mxu0 %v807
        %910 = vmatprep.subr.mxu0 %v806
        %911 = vmatpush1.msra.mxu0 %v805
        %912 = vmatprep.subr.mxu0 %v804
        %913 = vmatpush1.msra.mxu0 %v803
        %914 = vmatprep.subr.mxu0 %v802
        %915 = vmatpush1.msra.mxu0 %v801
        %916 = vmatprep.subr.mxu0 %v864
        %917 = vmatpush2.msra.mxu0 %v863
        %918 = vmatprep.subr.mxu0 %v862
        %919 = vmatpush2.msra.mxu0 %v861
        %920 = vmatprep.subr.mxu0 %v860
        %921 = vmatpush2.msra.mxu0 %v859
        %922 = vmatprep.subr.mxu0 %v858
        %923 = vmatpush2.msra.mxu0 %v857
        %924 = vmatprep.subr.mxu0 %v856
        %925 = vmatpush2.msra.mxu0 %v855
        %926 = vmatprep.subr.mxu0 %v854
        %927 = vmatpush2.msra.mxu0 %v853
        %928 = vmatprep.subr.mxu0 %v852
        %929 = vmatpush2.msra.mxu0 %v851
        %930 = vmatprep.subr.mxu0 %v850
        %931 = vmatpush2.msra.mxu0 %v849
        %932 = vmatprep.subr.mxu0 %v848
        %933 = vmatpush2.msra.mxu0 %v847
        %934 = vmatprep.subr.mxu0 %v846
        %935 = vmatpush2.msra.mxu0 %v845
        %936 = vmatprep.subr.mxu0 %v844
        %937 = vmatpush2.msra.mxu0 %v843
        %938 = vmatprep.subr.mxu0 %v842
        %939 = vmatpush2.msra.mxu0 %v841
        %940 = vmatprep.subr.mxu0 %v840
        %941 = vmatpush2.msra.mxu0 %v839
        %942 = vmatprep.subr.mxu0 %v838
        %943 = vmatpush2.msra.mxu0 %v837
        %944 = vmatprep.subr.mxu0 %v836
        %945 = vmatpush2.msra.mxu0 %v835
        %946 = vmatprep.subr.mxu0 %v834
        %947 = vmatpush2.msra.mxu0 %v833
        %948 = vmatprep.mubr.f32.mxu0 %v875
        %949 = vmatmul.mubr.f32.gmra.mxu0 %v872
        %v950 = vpop.f32.mrf.mxu0
        %v951 = vadd.f32 0.0, %v950
        %v952 = vpop.f32.mrf.mxu0
        %v953 = vadd.f32 0.0, %v952
        %954 = vmatprep.mubr.f32.mxu0 %v879
        %955 = vmatmul.mubr.f32.gmra.mxu0 %v877
        %v956 = vpop.f32.mrf.mxu0
        %v957 = vadd.f32 0.0, %v956
        %v958 = vpop.f32.mrf.mxu0
        %v959 = vadd.f32 0.0, %v958
        %960 = vdwg.mxu0
        %v961 = vadd.f32 %v786, %v951
        %v962 = vadd.f32 %v788, %v953
        %v963 = vadd.f32 %v792, %v957
        %v964 = vadd.f32 %v794, %v959
        %v965 = vld [vmem:[%s2] sm:$0x3]
        %v966 = vld [vmem:[%s3] sm:$0x3]
        %v967 = vld [vmem:[%s4] sm:$0x3]
        %v969 = vlaneseq
        %v970 = vshrl.u32 %v969, 7
        %v971 = vsub.s32 0, %v970
        %v972 = vrot.slane %v965, %v971
        %v973 = vlaneseq
        %v974 = vshrl.u32 %v973, 7
        %v975 = vsub.s32 1, %v974
        %v976 = vrot.slane %v965, %v975
        %v979 = vadd.f32 %v961, %v972
        %v980 = vadd.f32 %v962, %v976
        %v981 = vadd.f32 %v963, %v972
        %v982 = vadd.f32 %v964, %v976
        %v983 = vadd.f32 %v979, %v981
        %v984 = vrot.slane %v983, 4
        %v985 = vadd.f32 %v983, %v984
        %v986 = vrot.slane %v985, 2
        %v987 = vadd.f32 %v985, %v986
        %v988 = vrot.slane %v987, 1
        %v989 = vadd.f32 %v987, %v988
        %v990 = vadd.f32 %v980, %v982
        %v991 = vrot.slane %v990, 4
        %v992 = vadd.f32 %v990, %v991
        %v993 = vrot.slane %v992, 2
        %v994 = vadd.f32 %v992, %v993
        %v995 = vrot.slane %v994, 1
        %v996 = vadd.f32 %v994, %v995
        %v997 = vmul.f32 %v979, %v979
        %v998 = vmul.f32 %v980, %v980
        %v999 = vmul.f32 %v981, %v981
        %v1000 = vmul.f32 %v982, %v982
        %v1001 = vadd.f32 %v997, %v999
        %v1002 = vrot.slane %v1001, 4
        %v1003 = vadd.f32 %v1001, %v1002
        %v1004 = vrot.slane %v1003, 2
        %v1005 = vadd.f32 %v1003, %v1004
        %v1006 = vrot.slane %v1005, 1
        %v1007 = vadd.f32 %v1005, %v1006
        %v1008 = vadd.f32 %v998, %v1000
        %v1009 = vrot.slane %v1008, 4
        %v1010 = vadd.f32 %v1008, %v1009
        %v1011 = vrot.slane %v1010, 2
        %v1012 = vadd.f32 %v1010, %v1011
        %v1013 = vrot.slane %v1012, 1
        %v1014 = vadd.f32 %v1012, %v1013
        %v1015 = vsel %vm465, %v989, %v1007
        %v1016 = vsel %vm465, %v996, %v1014
        %1017 = vmatprep.subr.mxu0 0.0
        %1018 = vmatpush1.msra.mxu0 %v439
        %1019 = vmatprep.subr.mxu0 0.0
        %1020 = vmatpush1.msra.mxu0 %v438
        %1021 = vmatprep.subr.mxu0 0.0
        %1022 = vmatpush1.msra.mxu0 %v437
        %1023 = vmatprep.subr.mxu0 0.0
        %1024 = vmatpush1.msra.mxu0 %v436
        %1025 = vmatprep.subr.mxu0 0.0
        %1026 = vmatpush1.msra.mxu0 %v435
        %1027 = vmatprep.subr.mxu0 0.0
        %1028 = vmatpush1.msra.mxu0 %v434
        %1029 = vmatprep.subr.mxu0 0.0
        %1030 = vmatpush1.msra.mxu0 %v433
        %1031 = vmatprep.subr.mxu0 0.0
        %1032 = vmatpush1.msra.mxu0 %v432
        %1033 = vmatprep.subr.mxu0 0.0
        %1034 = vmatpush1.msra.mxu0 %v431
        %1035 = vmatprep.subr.mxu0 0.0
        %1036 = vmatpush1.msra.mxu0 %v430
        %1037 = vmatprep.subr.mxu0 0.0
        %1038 = vmatpush1.msra.mxu0 %v429
        %1039 = vmatprep.subr.mxu0 0.0
        %1040 = vmatpush1.msra.mxu0 %v428
        %1041 = vmatprep.subr.mxu0 0.0
        %1042 = vmatpush1.msra.mxu0 %v427
        %1043 = vmatprep.subr.mxu0 0.0
        %1044 = vmatpush1.msra.mxu0 %v426
        %1045 = vmatprep.subr.mxu0 0.0
        %1046 = vmatpush1.msra.mxu0 %v425
        %1047 = vmatprep.subr.mxu0 0.0
        %1048 = vmatpush1.msra.mxu0 %v424
        %1049 = vmatprep.subr.mxu0 0.0
        %1050 = vmatpush2.msra.mxu0 %v455
        %1051 = vmatprep.subr.mxu0 0.0
        %1052 = vmatpush2.msra.mxu0 %v454
        %1053 = vmatprep.subr.mxu0 0.0
        %1054 = vmatpush2.msra.mxu0 %v453
        %1055 = vmatprep.subr.mxu0 0.0
        %1056 = vmatpush2.msra.mxu0 %v452
        %1057 = vmatprep.subr.mxu0 0.0
        %1058 = vmatpush2.msra.mxu0 %v451
        %1059 = vmatprep.subr.mxu0 0.0
        %1060 = vmatpush2.msra.mxu0 %v450
        %1061 = vmatprep.subr.mxu0 0.0
        %1062 = vmatpush2.msra.mxu0 %v449
        %1063 = vmatprep.subr.mxu0 0.0
        %1064 = vmatpush2.msra.mxu0 %v448
        %1065 = vmatprep.subr.mxu0 0.0
        %1066 = vmatpush2.msra.mxu0 %v447
        %1067 = vmatprep.subr.mxu0 0.0
        %1068 = vmatpush2.msra.mxu0 %v446
        %1069 = vmatprep.subr.mxu0 0.0
        %1070 = vmatpush2.msra.mxu0 %v445
        %1071 = vmatprep.subr.mxu0 0.0
        %1072 = vmatpush2.msra.mxu0 %v444
        %1073 = vmatprep.subr.mxu0 0.0
        %1074 = vmatpush2.msra.mxu0 %v443
        %1075 = vmatprep.subr.mxu0 0.0
        %1076 = vmatpush2.msra.mxu0 %v442
        %1077 = vmatprep.subr.mxu0 0.0
        %1078 = vmatpush2.msra.mxu0 %v441
        %1079 = vmatprep.subr.mxu0 0.0
        %1080 = vmatpush2.msra.mxu0 %v440
        %1081 = vmatprep.mubr.f32.mxu0 %v1016
        %1082 = vmatmul.mubr.f32.gmra.mxu0 %v1015
        %v1083 = vpop.f32.mrf.mxu0
        %v1084 = vadd.f32 0.0, %v1083
        %v1085 = vpop.f32.mrf.mxu0
        %1086 = vdwg.mxu0
        %v1087 = vmul.f32 %v1084, 0.00048828125
        %v1088 = vmul.f32 %v1087, %v1087
        %v1090 = vrot.slane %v1088, 7
        %v1092 = vsub.f32 %v1087, %v1090
        %v1093 = vadd.f32 %v1092, 1e-05
        %v1094 = vrsqrt.pop %v1093
        %v1095 = vsel %vm465, %v1087, %v1094
        %v1098 = vunpack.c.l.s4 1983009808
        %v1099 = vunpack.c.0.s8 %v1098
        %v1100 = vlaneseq
        %v1101 = vshrl.u32 %v1100, 7
        %v1102 = vsub.s32 %v1099, %v1101
        %v1103 = vrot.slane %v456, %v1102
        %v1104 = vcombine.high %v1103, %v1103
        %vm1105 = vcmask 15360
        %v1107 = vsel %vm1105, %v1095, 0
        %vm1109 = vcmask 1041408
        %v1110 = vsel %vm1109, %v1103, 0
        %v1112 = vsel %vm1109, %v1104, 0
        %1114 = vmatprep.subr.mxu0 0.0
        %1115 = vmatpush1.msra.mxu0 0.0
        %1116 = vmatprep.subr.mxu0 0.0
        %1117 = vmatpush1.msra.mxu0 0.0
        %1118 = vmatprep.subr.mxu0 0.0
        %1119 = vmatpush1.msra.mxu0 0.0
        %1120 = vmatprep.subr.mxu0 0.0
        %1121 = vmatpush1.msra.mxu0 0.0
        %1122 = vmatprep.subr.mxu0 0.0
        %1123 = vmatpush1.msra.mxu0 0.0
        %1124 = vmatprep.subr.mxu0 0.0
        %1125 = vmatpush1.msra.mxu0 0.0
        %1126 = vmatprep.subr.mxu0 0.0
        %1127 = vmatpush1.msra.mxu0 0.0
        %1128 = vmatprep.subr.mxu0 0.0
        %1129 = vmatpush1.msra.mxu0 0.0
        %1130 = vmatprep.subr.mxu0 0.0
        %1131 = vmatpush1.msra.mxu0 0.0
        %1132 = vmatprep.subr.mxu0 0.0
        %1133 = vmatpush1.msra.mxu0 0.0
        %1134 = vmatprep.subr.mxu0 0.0
        %1135 = vmatpush1.msra.mxu0 0.0
        %1136 = vmatprep.subr.mxu0 0.0
        %1137 = vmatpush1.msra.mxu0 0.0
        %1138 = vmatprep.subr.mxu0 0.0
        %1139 = vmatpush1.msra.mxu0 0.0
        %1140 = vmatprep.subr.mxu0 0.0
        %1141 = vmatpush1.msra.mxu0 0.0
        %1142 = vmatprep.subr.mxu0 0.0
        %1143 = vmatpush1.msra.mxu0 0.0
        %1144 = vmatprep.subr.mxu0 %v1112
        %1145 = vmatpush1.msra.mxu0 %v1110
        %1146 = vmatprep.subr.mxu0 0.0
        %1147 = vmatpush2.msra.mxu0 0.0
        %1148 = vmatprep.subr.mxu0 0.0
        %1149 = vmatpush2.msra.mxu0 0.0
        %1150 = vmatprep.subr.mxu0 0.0
        %1151 = vmatpush2.msra.mxu0 0.0
        %1152 = vmatprep.subr.mxu0 0.0
        %1153 = vmatpush2.msra.mxu0 0.0
        %1154 = vmatprep.subr.mxu0 0.0
        %1155 = vmatpush2.msra.mxu0 0.0
        %1156 = vmatprep.subr.mxu0 0.0
        %1157 = vmatpush2.msra.mxu0 0.0
        %1158 = vmatprep.subr.mxu0 0.0
        %1159 = vmatpush2.msra.mxu0 0.0
        %1160 = vmatprep.subr.mxu0 0.0
        %1161 = vmatpush2.msra.mxu0 0.0
        %1162 = vmatprep.subr.mxu0 0.0
        %1163 = vmatpush2.msra.mxu0 0.0
        %1164 = vmatprep.subr.mxu0 0.0
        %1165 = vmatpush2.msra.mxu0 0.0
        %1166 = vmatprep.subr.mxu0 0.0
        %1167 = vmatpush2.msra.mxu0 0.0
        %1168 = vmatprep.subr.mxu0 0.0
        %1169 = vmatpush2.msra.mxu0 0.0
        %1170 = vmatprep.subr.mxu0 0.0
        %1171 = vmatpush2.msra.mxu0 0.0
        %1172 = vmatprep.subr.mxu0 0.0
        %1173 = vmatpush2.msra.mxu0 0.0
        %1174 = vmatprep.subr.mxu0 0.0
        %1175 = vmatpush2.msra.mxu0 0.0
        %1176 = vmatprep.subr.mxu0 0.0
        %1177 = vmatpush2.msra.mxu0 0.0
        %1178 = vmatprep.mubr.f32.mxu0 0.0
        %1179 = vmatmul.mubr.f32.gmra.mxu0 %v1107
        %v1180 = vpop.f32.mrf.mxu0
        %v1181 = vadd.f32 0.0, %v1180
        %v1182 = vpop.f32.mrf.mxu0
        %v1183 = vadd.f32 0.0, %v1182
        %1184 = vdwg.mxu0
        %v1187 = vcombine.low %v1181, %v1183
        %v1189 = vunpack.c.l.s4 1966171168
        %v1190 = vunpack.c.0.s8 %v1189
        %v1191 = vlaneseq
        %v1192 = vshrl.u32 %v1191, 7
        %v1193 = vsub.s32 %v1190, %v1192
        %v1194 = vrot.slane %v1187, %v1193
        %v1195 = vcombine.high %v1194, %v1194
        %v1197 = vunpack.c.l.s4 1966171168
        %v1198 = vunpack.c.0.s8 %v1197
        %v1199 = vlaneseq
        %v1200 = vshrl.u32 %v1199, 7
        %v1201 = vsub.s32 %v1198, %v1200
        %v1202 = vrot.slane %v1195, %v1201
        %v1204 = vmul.f32 %v966, %v1202
        %v1206 = vlaneseq
        %v1207 = vshrl.u32 %v1206, 7
        %v1208 = vsub.s32 0, %v1207
        %v1209 = vrot.slane %v1204, %v1208
        %v1210 = vlaneseq
        %v1211 = vshrl.u32 %v1210, 7
        %v1212 = vsub.s32 1, %v1211
        %v1213 = vrot.slane %v1204, %v1212
        %v1216 = vmul.f32 %v1181, %v1209
        %v1217 = vmul.f32 %v1183, %v1213
        %v1220 = vcombine.low %v1216, %v1217
        %v1222 = vunpack.c.l.s4 1966171168
        %v1223 = vunpack.c.0.s8 %v1222
        %v1224 = vlaneseq
        %v1225 = vshrl.u32 %v1224, 7
        %v1226 = vsub.s32 %v1223, %v1225
        %v1227 = vrot.slane %v1220, %v1226
        %v1229 = vunpack.c.l.s4 1966171168
        %v1230 = vunpack.c.0.s8 %v1229
        %v1231 = vlaneseq
        %v1232 = vshrl.u32 %v1231, 7
        %v1233 = vsub.s32 %v1230, %v1232
        %v1234 = vrot.slane %v1227, %v1233
        %v1236 = vsub.f32 %v967, %v1234
        %v1237 = vmul.f32 %v979, %v1209
        %v1238 = vmul.f32 %v980, %v1213
        %v1239 = vmul.f32 %v981, %v1209
        %v1240 = vmul.f32 %v982, %v1213
        %v1242 = vlaneseq
        %v1243 = vshrl.u32 %v1242, 7
        %v1244 = vsub.s32 0, %v1243
        %v1245 = vrot.slane %v1236, %v1244
        %v1246 = vlaneseq
        %v1247 = vshrl.u32 %v1246, 7
        %v1248 = vsub.s32 1, %v1247
        %v1249 = vrot.slane %v1236, %v1248
        %v1252 = vadd.f32 %v1237, %v1245
        %v1253 = vadd.f32 %v1238, %v1249
        %v1254 = vadd.f32 %v1239, %v1245
        %v1255 = vadd.f32 %v1240, %v1249
        %v1256 = vmax.f32 %v1252, 0.0
        %v1257 = vmax.f32 %v1253, 0.0
        %v1258 = vmax.f32 %v1254, 0.0
        %v1259 = vmax.f32 %v1255, 0.0
        %v1264 = vrot.slane %v1256, 7
        %v1265 = vrot.slane %v1257, 7
        %v1266 = vrot.slane %v1258, 7
        %v1267 = vsel %vm465, %v1264, %v1266
        %v1268 = vrot.slane %v1259, 7
        %v1269 = vsel %vm465, %v1265, %v1268
        %1276 = vst [vmem:[#allocation2] sm:$0xfe] %v1264
        %1277 = vst [vmem:[#allocation2 + $0x8] sm:$0xfe] %v1265
        %1278 = vst [vmem:[#allocation2 + $0x10] sm:$0xff] %v1267
        %1279 = vst [vmem:[#allocation2 + $0x18] sm:$0xff] %v1269
        %1280 = vst [vmem:[#allocation2 + $0x20] sm:$0x1] %v1266
        %1281 = vst [vmem:[#allocation2 + $0x28] sm:$0x1] %v1268
        %v1282 = vld [vmem:[#allocation2] sm:$0xff]
        %v1283 = vld [vmem:[#allocation2 + $0x8] sm:$0xff]
        %v1284 = vld [vmem:[#allocation2 + $0x10] sm:$0xff]
        %v1285 = vld [vmem:[#allocation2 + $0x18] sm:$0xff]
        %v1286 = vld [vmem:[#allocation6] sm:$0xff]
        %v1287 = vld [vmem:[#allocation6 + $0x8] sm:$0xff]
        %v1288 = vld [vmem:[#allocation6 + $0x10] sm:$0xff]
        %v1289 = vld [vmem:[#allocation6 + $0x18] sm:$0xff]
        %v1290 = vld [vmem:[#allocation6 + $0x20] sm:$0xff]
        %v1291 = vld [vmem:[#allocation6 + $0x28] sm:$0xff]
        %v1292 = vld [vmem:[#allocation6 + $0x30] sm:$0xff]
        %v1293 = vld [vmem:[#allocation6 + $0x38] sm:$0xff]
        %v1294 = vld [vmem:[#allocation6 + $0x40] sm:$0xff]
        %v1295 = vld [vmem:[#allocation6 + $0x48] sm:$0xff]
        %v1296 = vld [vmem:[#allocation6 + $0x50] sm:$0xff]
        %v1297 = vld [vmem:[#allocation6 + $0x58] sm:$0xff]
        %v1298 = vld [vmem:[#allocation6 + $0x60] sm:$0xff]
        %v1299 = vld [vmem:[#allocation6 + $0x68] sm:$0xff]
        %v1300 = vld [vmem:[#allocation6 + $0x70] sm:$0xff]
        %v1301 = vld [vmem:[#allocation6 + $0x78] sm:$0xff]
        %v1302 = vld [vmem:[#allocation6 + $0x80] sm:$0xff]
        %v1303 = vld [vmem:[#allocation6 + $0x88] sm:$0xff]
        %v1304 = vld [vmem:[#allocation6 + $0x90] sm:$0xff]
        %v1305 = vld [vmem:[#allocation6 + $0x98] sm:$0xff]
        %v1306 = vld [vmem:[#allocation6 + $0xa0] sm:$0xff]
        %v1307 = vld [vmem:[#allocation6 + $0xa8] sm:$0xff]
        %v1308 = vld [vmem:[#allocation6 + $0xb0] sm:$0xff]
        %v1309 = vld [vmem:[#allocation6 + $0xb8] sm:$0xff]
        %v1310 = vld [vmem:[#allocation6 + $0xc0] sm:$0xff]
        %v1311 = vld [vmem:[#allocation6 + $0xc8] sm:$0xff]
        %v1312 = vld [vmem:[#allocation6 + $0xd0] sm:$0xff]
        %v1313 = vld [vmem:[#allocation6 + $0xd8] sm:$0xff]
        %v1314 = vld [vmem:[#allocation6 + $0xe0] sm:$0xff]
        %v1315 = vld [vmem:[#allocation6 + $0xe8] sm:$0xff]
        %v1316 = vld [vmem:[#allocation6 + $0xf0] sm:$0xff]
        %v1317 = vld [vmem:[#allocation6 + $0xf8] sm:$0xff]
        %v1318 = vld [vmem:[#allocation6 + $0x100] sm:$0xff]
        %v1319 = vld [vmem:[#allocation6 + $0x108] sm:$0xff]
        %v1320 = vld [vmem:[#allocation6 + $0x110] sm:$0xff]
        %v1321 = vld [vmem:[#allocation6 + $0x118] sm:$0xff]
        %v1322 = vld [vmem:[#allocation6 + $0x120] sm:$0xff]
        %v1323 = vld [vmem:[#allocation6 + $0x128] sm:$0xff]
        %v1324 = vld [vmem:[#allocation6 + $0x130] sm:$0xff]
        %v1325 = vld [vmem:[#allocation6 + $0x138] sm:$0xff]
        %v1326 = vld [vmem:[#allocation6 + $0x140] sm:$0xff]
        %v1327 = vld [vmem:[#allocation6 + $0x148] sm:$0xff]
        %v1328 = vld [vmem:[#allocation6 + $0x150] sm:$0xff]
        %v1329 = vld [vmem:[#allocation6 + $0x158] sm:$0xff]
        %v1330 = vld [vmem:[#allocation6 + $0x160] sm:$0xff]
        %v1331 = vld [vmem:[#allocation6 + $0x168] sm:$0xff]
        %v1332 = vld [vmem:[#allocation6 + $0x170] sm:$0xff]
        %v1333 = vld [vmem:[#allocation6 + $0x178] sm:$0xff]
        %v1334 = vld [vmem:[#allocation6 + $0x180] sm:$0xff]
        %v1335 = vld [vmem:[#allocation6 + $0x188] sm:$0xff]
        %v1336 = vld [vmem:[#allocation6 + $0x190] sm:$0xff]
        %v1337 = vld [vmem:[#allocation6 + $0x198] sm:$0xff]
        %v1338 = vld [vmem:[#allocation6 + $0x1a0] sm:$0xff]
        %v1339 = vld [vmem:[#allocation6 + $0x1a8] sm:$0xff]
        %v1340 = vld [vmem:[#allocation6 + $0x1b0] sm:$0xff]
        %v1341 = vld [vmem:[#allocation6 + $0x1b8] sm:$0xff]
        %v1342 = vld [vmem:[#allocation6 + $0x1c0] sm:$0xff]
        %v1343 = vld [vmem:[#allocation6 + $0x1c8] sm:$0xff]
        %v1344 = vld [vmem:[#allocation6 + $0x1d0] sm:$0xff]
        %v1345 = vld [vmem:[#allocation6 + $0x1d8] sm:$0xff]
        %v1346 = vld [vmem:[#allocation6 + $0x1e0] sm:$0xff]
        %v1347 = vld [vmem:[#allocation6 + $0x1e8] sm:$0xff]
        %v1348 = vld [vmem:[#allocation6 + $0x1f0] sm:$0xff]
        %v1349 = vld [vmem:[#allocation6 + $0x1f8] sm:$0xff]
        %v1350 = vld [vmem:[#allocation2] sm:$0xfe]
        %v1351 = vld [vmem:[#allocation2 + $0x8] sm:$0xfe]
        %v1352 = vld [vmem:[#allocation2 + $0x20] sm:$0x1]
        %v1353 = vld [vmem:[#allocation2 + $0x28] sm:$0x1]
        %s1354 = scalar_lea.vmem [#allocation6], 512
        %v1355 = vld [vmem:[%s1354] sm:$0xff]
        %v1356 = vld [vmem:[%s1354 + $0x8] sm:$0xff]
        %v1357 = vld [vmem:[%s1354 + $0x10] sm:$0xff]
        %v1358 = vld [vmem:[%s1354 + $0x18] sm:$0xff]
        %v1359 = vld [vmem:[%s1354 + $0x20] sm:$0xff]
        %v1360 = vld [vmem:[%s1354 + $0x28] sm:$0xff]
        %v1361 = vld [vmem:[%s1354 + $0x30] sm:$0xff]
        %v1362 = vld [vmem:[%s1354 + $0x38] sm:$0xff]
        %v1363 = vld [vmem:[%s1354 + $0x40] sm:$0xff]
        %v1364 = vld [vmem:[%s1354 + $0x48] sm:$0xff]
        %v1365 = vld [vmem:[%s1354 + $0x50] sm:$0xff]
        %v1366 = vld [vmem:[%s1354 + $0x58] sm:$0xff]
        %v1367 = vld [vmem:[%s1354 + $0x60] sm:$0xff]
        %v1368 = vld [vmem:[%s1354 + $0x68] sm:$0xff]
        %v1369 = vld [vmem:[%s1354 + $0x70] sm:$0xff]
        %v1370 = vld [vmem:[%s1354 + $0x78] sm:$0xff]
        %v1371 = vld [vmem:[%s1354 + $0x80] sm:$0xff]
        %v1372 = vld [vmem:[%s1354 + $0x88] sm:$0xff]
        %v1373 = vld [vmem:[%s1354 + $0x90] sm:$0xff]
        %v1374 = vld [vmem:[%s1354 + $0x98] sm:$0xff]
        %v1375 = vld [vmem:[%s1354 + $0xa0] sm:$0xff]
        %v1376 = vld [vmem:[%s1354 + $0xa8] sm:$0xff]
        %v1377 = vld [vmem:[%s1354 + $0xb0] sm:$0xff]
        %v1378 = vld [vmem:[%s1354 + $0xb8] sm:$0xff]
        %v1379 = vld [vmem:[%s1354 + $0xc0] sm:$0xff]
        %v1380 = vld [vmem:[%s1354 + $0xc8] sm:$0xff]
        %v1381 = vld [vmem:[%s1354 + $0xd0] sm:$0xff]
        %v1382 = vld [vmem:[%s1354 + $0xd8] sm:$0xff]
        %v1383 = vld [vmem:[%s1354 + $0xe0] sm:$0xff]
        %v1384 = vld [vmem:[%s1354 + $0xe8] sm:$0xff]
        %v1385 = vld [vmem:[%s1354 + $0xf0] sm:$0xff]
        %v1386 = vld [vmem:[%s1354 + $0xf8] sm:$0xff]
        %v1387 = vld [vmem:[%s1354 + $0x100] sm:$0xff]
        %v1388 = vld [vmem:[%s1354 + $0x108] sm:$0xff]
        %v1389 = vld [vmem:[%s1354 + $0x110] sm:$0xff]
        %v1390 = vld [vmem:[%s1354 + $0x118] sm:$0xff]
        %v1391 = vld [vmem:[%s1354 + $0x120] sm:$0xff]
        %v1392 = vld [vmem:[%s1354 + $0x128] sm:$0xff]
        %v1393 = vld [vmem:[%s1354 + $0x130] sm:$0xff]
        %v1394 = vld [vmem:[%s1354 + $0x138] sm:$0xff]
        %v1395 = vld [vmem:[%s1354 + $0x140] sm:$0xff]
        %v1396 = vld [vmem:[%s1354 + $0x148] sm:$0xff]
        %v1397 = vld [vmem:[%s1354 + $0x150] sm:$0xff]
        %v1398 = vld [vmem:[%s1354 + $0x158] sm:$0xff]
        %v1399 = vld [vmem:[%s1354 + $0x160] sm:$0xff]
        %v1400 = vld [vmem:[%s1354 + $0x168] sm:$0xff]
        %v1401 = vld [vmem:[%s1354 + $0x170] sm:$0xff]
        %v1402 = vld [vmem:[%s1354 + $0x178] sm:$0xff]
        %v1403 = vld [vmem:[%s1354 + $0x180] sm:$0xff]
        %v1404 = vld [vmem:[%s1354 + $0x188] sm:$0xff]
        %v1405 = vld [vmem:[%s1354 + $0x190] sm:$0xff]
        %v1406 = vld [vmem:[%s1354 + $0x198] sm:$0xff]
        %v1407 = vld [vmem:[%s1354 + $0x1a0] sm:$0xff]
        %v1408 = vld [vmem:[%s1354 + $0x1a8] sm:$0xff]
        %v1409 = vld [vmem:[%s1354 + $0x1b0] sm:$0xff]
        %v1410 = vld [vmem:[%s1354 + $0x1b8] sm:$0xff]
        %v1411 = vld [vmem:[%s1354 + $0x1c0] sm:$0xff]
        %v1412 = vld [vmem:[%s1354 + $0x1c8] sm:$0xff]
        %v1413 = vld [vmem:[%s1354 + $0x1d0] sm:$0xff]
        %v1414 = vld [vmem:[%s1354 + $0x1d8] sm:$0xff]
        %v1415 = vld [vmem:[%s1354 + $0x1e0] sm:$0xff]
        %v1416 = vld [vmem:[%s1354 + $0x1e8] sm:$0xff]
        %v1417 = vld [vmem:[%s1354 + $0x1f0] sm:$0xff]
        %v1418 = vld [vmem:[%s1354 + $0x1f8] sm:$0xff]
        %v1425 = vrot.slane %v1350, 1
        %v1426 = vrot.slane %v1284, 1
        %v1427 = vsel %vm627, %v1425, %v1426
        %v1428 = vrot.slane %v1351, 1
        %v1429 = vrot.slane %v1285, 1
        %v1430 = vsel %vm627, %v1428, %v1429
        %v1431 = vrot.slane %v1352, 1
        %v1432 = vsel %vm627, %v1426, %v1431
        %v1433 = vrot.slane %v1353, 1
        %v1434 = vsel %vm627, %v1429, %v1433
        %1439 = vmatprep.subr.mxu0 %v1386
        %1440 = vmatpush1.msra.mxu0 %v1385
        %1441 = vmatprep.subr.mxu0 %v1384
        %1442 = vmatpush1.msra.mxu0 %v1383
        %1443 = vmatprep.subr.mxu0 %v1382
        %1444 = vmatpush1.msra.mxu0 %v1381
        %1445 = vmatprep.subr.mxu0 %v1380
        %1446 = vmatpush1.msra.mxu0 %v1379
        %1447 = vmatprep.subr.mxu0 %v1378
        %1448 = vmatpush1.msra.mxu0 %v1377
        %1449 = vmatprep.subr.mxu0 %v1376
        %1450 = vmatpush1.msra.mxu0 %v1375
        %1451 = vmatprep.subr.mxu0 %v1374
        %1452 = vmatpush1.msra.mxu0 %v1373
        %1453 = vmatprep.subr.mxu0 %v1372
        %1454 = vmatpush1.msra.mxu0 %v1371
        %1455 = vmatprep.subr.mxu0 %v1370
        %1456 = vmatpush1.msra.mxu0 %v1369
        %1457 = vmatprep.subr.mxu0 %v1368
        %1458 = vmatpush1.msra.mxu0 %v1367
        %1459 = vmatprep.subr.mxu0 %v1366
        %1460 = vmatpush1.msra.mxu0 %v1365
        %1461 = vmatprep.subr.mxu0 %v1364
        %1462 = vmatpush1.msra.mxu0 %v1363
        %1463 = vmatprep.subr.mxu0 %v1362
        %1464 = vmatpush1.msra.mxu0 %v1361
        %1465 = vmatprep.subr.mxu0 %v1360
        %1466 = vmatpush1.msra.mxu0 %v1359
        %1467 = vmatprep.subr.mxu0 %v1358
        %1468 = vmatpush1.msra.mxu0 %v1357
        %1469 = vmatprep.subr.mxu0 %v1356
        %1470 = vmatpush1.msra.mxu0 %v1355
        %1471 = vmatprep.subr.mxu0 %v1418
        %1472 = vmatpush2.msra.mxu0 %v1417
        %1473 = vmatprep.subr.mxu0 %v1416
        %1474 = vmatpush2.msra.mxu0 %v1415
        %1475 = vmatprep.subr.mxu0 %v1414
        %1476 = vmatpush2.msra.mxu0 %v1413
        %1477 = vmatprep.subr.mxu0 %v1412
        %1478 = vmatpush2.msra.mxu0 %v1411
        %1479 = vmatprep.subr.mxu0 %v1410
        %1480 = vmatpush2.msra.mxu0 %v1409
        %1481 = vmatprep.subr.mxu0 %v1408
        %1482 = vmatpush2.msra.mxu0 %v1407
        %1483 = vmatprep.subr.mxu0 %v1406
        %1484 = vmatpush2.msra.mxu0 %v1405
        %1485 = vmatprep.subr.mxu0 %v1404
        %1486 = vmatpush2.msra.mxu0 %v1403
        %1487 = vmatprep.subr.mxu0 %v1402
        %1488 = vmatpush2.msra.mxu0 %v1401
        %1489 = vmatprep.subr.mxu0 %v1400
        %1490 = vmatpush2.msra.mxu0 %v1399
        %1491 = vmatprep.subr.mxu0 %v1398
        %1492 = vmatpush2.msra.mxu0 %v1397
        %1493 = vmatprep.subr.mxu0 %v1396
        %1494 = vmatpush2.msra.mxu0 %v1395
        %1495 = vmatprep.subr.mxu0 %v1394
        %1496 = vmatpush2.msra.mxu0 %v1393
        %1497 = vmatprep.subr.mxu0 %v1392
        %1498 = vmatpush2.msra.mxu0 %v1391
        %1499 = vmatprep.subr.mxu0 %v1390
        %1500 = vmatpush2.msra.mxu0 %v1389
        %1501 = vmatprep.subr.mxu0 %v1388
        %1502 = vmatpush2.msra.mxu0 %v1387
        %1503 = vmatprep.mubr.f32.mxu0 %v1430
        %1504 = vmatmul.mubr.f32.gmra.mxu0 %v1427
        %v1505 = vpop.f32.mrf.mxu0
        %v1506 = vadd.f32 0.0, %v1505
        %v1507 = vpop.f32.mrf.mxu0
        %v1508 = vadd.f32 0.0, %v1507
        %1509 = vmatprep.mubr.f32.mxu0 %v1434
        %1510 = vmatmul.mubr.f32.gmra.mxu0 %v1432
        %v1511 = vpop.f32.mrf.mxu0
        %v1512 = vadd.f32 0.0, %v1511
        %v1513 = vpop.f32.mrf.mxu0
        %v1514 = vadd.f32 0.0, %v1513
        %1515 = vdwg.mxu0
        %1516 = vmatprep.subr.mxu0 %v1317
        %1517 = vmatpush1.msra.mxu0 %v1316
        %1518 = vmatprep.subr.mxu0 %v1315
        %1519 = vmatpush1.msra.mxu0 %v1314
        %1520 = vmatprep.subr.mxu0 %v1313
        %1521 = vmatpush1.msra.mxu0 %v1312
        %1522 = vmatprep.subr.mxu0 %v1311
        %1523 = vmatpush1.msra.mxu0 %v1310
        %1524 = vmatprep.subr.mxu0 %v1309
        %1525 = vmatpush1.msra.mxu0 %v1308
        %1526 = vmatprep.subr.mxu0 %v1307
        %1527 = vmatpush1.msra.mxu0 %v1306
        %1528 = vmatprep.subr.mxu0 %v1305
        %1529 = vmatpush1.msra.mxu0 %v1304
        %1530 = vmatprep.subr.mxu0 %v1303
        %1531 = vmatpush1.msra.mxu0 %v1302
        %1532 = vmatprep.subr.mxu0 %v1301
        %1533 = vmatpush1.msra.mxu0 %v1300
        %1534 = vmatprep.subr.mxu0 %v1299
        %1535 = vmatpush1.msra.mxu0 %v1298
        %1536 = vmatprep.subr.mxu0 %v1297
        %1537 = vmatpush1.msra.mxu0 %v1296
        %1538 = vmatprep.subr.mxu0 %v1295
        %1539 = vmatpush1.msra.mxu0 %v1294
        %1540 = vmatprep.subr.mxu0 %v1293
        %1541 = vmatpush1.msra.mxu0 %v1292
        %1542 = vmatprep.subr.mxu0 %v1291
        %1543 = vmatpush1.msra.mxu0 %v1290
        %1544 = vmatprep.subr.mxu0 %v1289
        %1545 = vmatpush1.msra.mxu0 %v1288
        %1546 = vmatprep.subr.mxu0 %v1287
        %1547 = vmatpush1.msra.mxu0 %v1286
        %1548 = vmatprep.subr.mxu0 %v1349
        %1549 = vmatpush2.msra.mxu0 %v1348
        %1550 = vmatprep.subr.mxu0 %v1347
        %1551 = vmatpush2.msra.mxu0 %v1346
        %1552 = vmatprep.subr.mxu0 %v1345
        %1553 = vmatpush2.msra.mxu0 %v1344
        %1554 = vmatprep.subr.mxu0 %v1343
        %1555 = vmatpush2.msra.mxu0 %v1342
        %1556 = vmatprep.subr.mxu0 %v1341
        %1557 = vmatpush2.msra.mxu0 %v1340
        %1558 = vmatprep.subr.mxu0 %v1339
        %1559 = vmatpush2.msra.mxu0 %v1338
        %1560 = vmatprep.subr.mxu0 %v1337
        %1561 = vmatpush2.msra.mxu0 %v1336
        %1562 = vmatprep.subr.mxu0 %v1335
        %1563 = vmatpush2.msra.mxu0 %v1334
        %1564 = vmatprep.subr.mxu0 %v1333
        %1565 = vmatpush2.msra.mxu0 %v1332
        %1566 = vmatprep.subr.mxu0 %v1331
        %1567 = vmatpush2.msra.mxu0 %v1330
        %1568 = vmatprep.subr.mxu0 %v1329
        %1569 = vmatpush2.msra.mxu0 %v1328
        %1570 = vmatprep.subr.mxu0 %v1327
        %1571 = vmatpush2.msra.mxu0 %v1326
        %1572 = vmatprep.subr.mxu0 %v1325
        %1573 = vmatpush2.msra.mxu0 %v1324
        %1574 = vmatprep.subr.mxu0 %v1323
        %1575 = vmatpush2.msra.mxu0 %v1322
        %1576 = vmatprep.subr.mxu0 %v1321
        %1577 = vmatpush2.msra.mxu0 %v1320
        %1578 = vmatprep.subr.mxu0 %v1319
        %1579 = vmatpush2.msra.mxu0 %v1318
        %1580 = vmatprep.mubr.f32.mxu0 %v1283
        %1581 = vmatmul.mubr.f32.gmra.mxu0 %v1282
        %v1582 = vpop.f32.mrf.mxu0
        %v1583 = vadd.f32 %v1506, %v1582
        %v1584 = vpop.f32.mrf.mxu0
        %v1585 = vadd.f32 %v1508, %v1584
        %1586 = vmatprep.mubr.f32.mxu0 %v1285
        %1587 = vmatmul.mubr.f32.gmra.mxu0 %v1284
        %v1588 = vpop.f32.mrf.mxu0
        %v1589 = vadd.f32 %v1512, %v1588
        %v1590 = vpop.f32.mrf.mxu0
        %v1591 = vadd.f32 %v1514, %v1590
        %1592 = vdwg.mxu0
        %v1593 = vld [vmem:[#allocation2] sm:$0xfc]
        %v1594 = vld [vmem:[#allocation2 + $0x8] sm:$0xfc]
        %v1595 = vld [vmem:[#allocation2 + $0x20] sm:$0x3]
        %v1596 = vld [vmem:[#allocation2 + $0x28] sm:$0x3]
        %s1597 = scalar_lea.vmem [#allocation6], 1024
        %v1598 = vld [vmem:[%s1597] sm:$0xff]
        %v1599 = vld [vmem:[%s1597 + $0x8] sm:$0xff]
        %v1600 = vld [vmem:[%s1597 + $0x10] sm:$0xff]
        %v1601 = vld [vmem:[%s1597 + $0x18] sm:$0xff]
        %v1602 = vld [vmem:[%s1597 + $0x20] sm:$0xff]
        %v1603 = vld [vmem:[%s1597 + $0x28] sm:$0xff]
        %v1604 = vld [vmem:[%s1597 + $0x30] sm:$0xff]
        %v1605 = vld [vmem:[%s1597 + $0x38] sm:$0xff]
        %v1606 = vld [vmem:[%s1597 + $0x40] sm:$0xff]
        %v1607 = vld [vmem:[%s1597 + $0x48] sm:$0xff]
        %v1608 = vld [vmem:[%s1597 + $0x50] sm:$0xff]
        %v1609 = vld [vmem:[%s1597 + $0x58] sm:$0xff]
        %v1610 = vld [vmem:[%s1597 + $0x60] sm:$0xff]
        %v1611 = vld [vmem:[%s1597 + $0x68] sm:$0xff]
        %v1612 = vld [vmem:[%s1597 + $0x70] sm:$0xff]
        %v1613 = vld [vmem:[%s1597 + $0x78] sm:$0xff]
        %v1614 = vld [vmem:[%s1597 + $0x80] sm:$0xff]
        %v1615 = vld [vmem:[%s1597 + $0x88] sm:$0xff]
        %v1616 = vld [vmem:[%s1597 + $0x90] sm:$0xff]
        %v1617 = vld [vmem:[%s1597 + $0x98] sm:$0xff]
        %v1618 = vld [vmem:[%s1597 + $0xa0] sm:$0xff]
        %v1619 = vld [vmem:[%s1597 + $0xa8] sm:$0xff]
        %v1620 = vld [vmem:[%s1597 + $0xb0] sm:$0xff]
        %v1621 = vld [vmem:[%s1597 + $0xb8] sm:$0xff]
        %v1622 = vld [vmem:[%s1597 + $0xc0] sm:$0xff]
        %v1623 = vld [vmem:[%s1597 + $0xc8] sm:$0xff]
        %v1624 = vld [vmem:[%s1597 + $0xd0] sm:$0xff]
        %v1625 = vld [vmem:[%s1597 + $0xd8] sm:$0xff]
        %v1626 = vld [vmem:[%s1597 + $0xe0] sm:$0xff]
        %v1627 = vld [vmem:[%s1597 + $0xe8] sm:$0xff]
        %v1628 = vld [vmem:[%s1597 + $0xf0] sm:$0xff]
        %v1629 = vld [vmem:[%s1597 + $0xf8] sm:$0xff]
        %v1630 = vld [vmem:[%s1597 + $0x100] sm:$0xff]
        %v1631 = vld [vmem:[%s1597 + $0x108] sm:$0xff]
        %v1632 = vld [vmem:[%s1597 + $0x110] sm:$0xff]
        %v1633 = vld [vmem:[%s1597 + $0x118] sm:$0xff]
        %v1634 = vld [vmem:[%s1597 + $0x120] sm:$0xff]
        %v1635 = vld [vmem:[%s1597 + $0x128] sm:$0xff]
        %v1636 = vld [vmem:[%s1597 + $0x130] sm:$0xff]
        %v1637 = vld [vmem:[%s1597 + $0x138] sm:$0xff]
        %v1638 = vld [vmem:[%s1597 + $0x140] sm:$0xff]
        %v1639 = vld [vmem:[%s1597 + $0x148] sm:$0xff]
        %v1640 = vld [vmem:[%s1597 + $0x150] sm:$0xff]
        %v1641 = vld [vmem:[%s1597 + $0x158] sm:$0xff]
        %v1642 = vld [vmem:[%s1597 + $0x160] sm:$0xff]
        %v1643 = vld [vmem:[%s1597 + $0x168] sm:$0xff]
        %v1644 = vld [vmem:[%s1597 + $0x170] sm:$0xff]
        %v1645 = vld [vmem:[%s1597 + $0x178] sm:$0xff]
        %v1646 = vld [vmem:[%s1597 + $0x180] sm:$0xff]
        %v1647 = vld [vmem:[%s1597 + $0x188] sm:$0xff]
        %v1648 = vld [vmem:[%s1597 + $0x190] sm:$0xff]
        %v1649 = vld [vmem:[%s1597 + $0x198] sm:$0xff]
        %v1650 = vld [vmem:[%s1597 + $0x1a0] sm:$0xff]
        %v1651 = vld [vmem:[%s1597 + $0x1a8] sm:$0xff]
        %v1652 = vld [vmem:[%s1597 + $0x1b0] sm:$0xff]
        %v1653 = vld [vmem:[%s1597 + $0x1b8] sm:$0xff]
        %v1654 = vld [vmem:[%s1597 + $0x1c0] sm:$0xff]
        %v1655 = vld [vmem:[%s1597 + $0x1c8] sm:$0xff]
        %v1656 = vld [vmem:[%s1597 + $0x1d0] sm:$0xff]
        %v1657 = vld [vmem:[%s1597 + $0x1d8] sm:$0xff]
        %v1658 = vld [vmem:[%s1597 + $0x1e0] sm:$0xff]
        %v1659 = vld [vmem:[%s1597 + $0x1e8] sm:$0xff]
        %v1660 = vld [vmem:[%s1597 + $0x1f0] sm:$0xff]
        %v1661 = vld [vmem:[%s1597 + $0x1f8] sm:$0xff]
        %v1666 = vrot.slane %v1593, 2
        %v1667 = vrot.slane %v1284, 2
        %v1668 = vsel %vm869, %v1666, %v1667
        %v1669 = vrot.slane %v1594, 2
        %v1670 = vrot.slane %v1285, 2
        %v1671 = vsel %vm869, %v1669, %v1670
        %v1672 = vrot.slane %v1595, 2
        %v1673 = vsel %vm869, %v1667, %v1672
        %v1674 = vrot.slane %v1596, 2
        %v1675 = vsel %vm869, %v1670, %v1674
        %1680 = vmatprep.subr.mxu0 %v1629
        %1681 = vmatpush1.msra.mxu0 %v1628
        %1682 = vmatprep.subr.mxu0 %v1627
        %1683 = vmatpush1.msra.mxu0 %v1626
        %1684 = vmatprep.subr.mxu0 %v1625
        %1685 = vmatpush1.msra.mxu0 %v1624
        %1686 = vmatprep.subr.mxu0 %v1623
        %1687 = vmatpush1.msra.mxu0 %v1622
        %1688 = vmatprep.subr.mxu0 %v1621
        %1689 = vmatpush1.msra.mxu0 %v1620
        %1690 = vmatprep.subr.mxu0 %v1619
        %1691 = vmatpush1.msra.mxu0 %v1618
        %1692 = vmatprep.subr.mxu0 %v1617
        %1693 = vmatpush1.msra.mxu0 %v1616
        %1694 = vmatprep.subr.mxu0 %v1615
        %1695 = vmatpush1.msra.mxu0 %v1614
        %1696 = vmatprep.subr.mxu0 %v1613
        %1697 = vmatpush1.msra.mxu0 %v1612
        %1698 = vmatprep.subr.mxu0 %v1611
        %1699 = vmatpush1.msra.mxu0 %v1610
        %1700 = vmatprep.subr.mxu0 %v1609
        %1701 = vmatpush1.msra.mxu0 %v1608
        %1702 = vmatprep.subr.mxu0 %v1607
        %1703 = vmatpush1.msra.mxu0 %v1606
        %1704 = vmatprep.subr.mxu0 %v1605
        %1705 = vmatpush1.msra.mxu0 %v1604
        %1706 = vmatprep.subr.mxu0 %v1603
        %1707 = vmatpush1.msra.mxu0 %v1602
        %1708 = vmatprep.subr.mxu0 %v1601
        %1709 = vmatpush1.msra.mxu0 %v1600
        %1710 = vmatprep.subr.mxu0 %v1599
        %1711 = vmatpush1.msra.mxu0 %v1598
        %1712 = vmatprep.subr.mxu0 %v1661
        %1713 = vmatpush2.msra.mxu0 %v1660
        %1714 = vmatprep.subr.mxu0 %v1659
        %1715 = vmatpush2.msra.mxu0 %v1658
        %1716 = vmatprep.subr.mxu0 %v1657
        %1717 = vmatpush2.msra.mxu0 %v1656
        %1718 = vmatprep.subr.mxu0 %v1655
        %1719 = vmatpush2.msra.mxu0 %v1654
        %1720 = vmatprep.subr.mxu0 %v1653
        %1721 = vmatpush2.msra.mxu0 %v1652
        %1722 = vmatprep.subr.mxu0 %v1651
        %1723 = vmatpush2.msra.mxu0 %v1650
        %1724 = vmatprep.subr.mxu0 %v1649
        %1725 = vmatpush2.msra.mxu0 %v1648
        %1726 = vmatprep.subr.mxu0 %v1647
        %1727 = vmatpush2.msra.mxu0 %v1646
        %1728 = vmatprep.subr.mxu0 %v1645
        %1729 = vmatpush2.msra.mxu0 %v1644
        %1730 = vmatprep.subr.mxu0 %v1643
        %1731 = vmatpush2.msra.mxu0 %v1642
        %1732 = vmatprep.subr.mxu0 %v1641
        %1733 = vmatpush2.msra.mxu0 %v1640
        %1734 = vmatprep.subr.mxu0 %v1639
        %1735 = vmatpush2.msra.mxu0 %v1638
        %1736 = vmatprep.subr.mxu0 %v1637
        %1737 = vmatpush2.msra.mxu0 %v1636
        %1738 = vmatprep.subr.mxu0 %v1635
        %1739 = vmatpush2.msra.mxu0 %v1634
        %1740 = vmatprep.subr.mxu0 %v1633
        %1741 = vmatpush2.msra.mxu0 %v1632
        %1742 = vmatprep.subr.mxu0 %v1631
        %1743 = vmatpush2.msra.mxu0 %v1630
        %1744 = vmatprep.mubr.f32.mxu0 %v1671
        %1745 = vmatmul.mubr.f32.gmra.mxu0 %v1668
        %v1746 = vpop.f32.mrf.mxu0
        %v1747 = vadd.f32 0.0, %v1746
        %v1748 = vpop.f32.mrf.mxu0
        %v1749 = vadd.f32 0.0, %v1748
        %1750 = vmatprep.mubr.f32.mxu0 %v1675
        %1751 = vmatmul.mubr.f32.gmra.mxu0 %v1673
        %v1752 = vpop.f32.mrf.mxu0
        %v1753 = vadd.f32 0.0, %v1752
        %v1754 = vpop.f32.mrf.mxu0
        %v1755 = vadd.f32 0.0, %v1754
        %1756 = vdwg.mxu0
        %v1757 = vadd.f32 %v1583, %v1747
        %v1758 = vadd.f32 %v1585, %v1749
        %v1759 = vadd.f32 %v1589, %v1753
        %v1760 = vadd.f32 %v1591, %v1755
        %v1761 = vld [vmem:[%s6] sm:$0x3]
        %v1762 = vld [vmem:[%s7] sm:$0x3]
        %v1763 = vld [vmem:[%s8] sm:$0x3]
        %v1765 = vlaneseq
        %v1766 = vshrl.u32 %v1765, 7
        %v1767 = vsub.s32 0, %v1766
        %v1768 = vrot.slane %v1761, %v1767
        %v1769 = vlaneseq
        %v1770 = vshrl.u32 %v1769, 7
        %v1771 = vsub.s32 1, %v1770
        %v1772 = vrot.slane %v1761, %v1771
        %v1775 = vadd.f32 %v1757, %v1768
        %v1776 = vadd.f32 %v1758, %v1772
        %v1777 = vadd.f32 %v1759, %v1768
        %v1778 = vadd.f32 %v1760, %v1772
        %v1779 = vadd.f32 %v1775, %v1777
        %v1780 = vrot.slane %v1779, 4
        %v1781 = vadd.f32 %v1779, %v1780
        %v1782 = vrot.slane %v1781, 2
        %v1783 = vadd.f32 %v1781, %v1782
        %v1784 = vrot.slane %v1783, 1
        %v1785 = vadd.f32 %v1783, %v1784
        %v1786 = vadd.f32 %v1776, %v1778
        %v1787 = vrot.slane %v1786, 4
        %v1788 = vadd.f32 %v1786, %v1787
        %v1789 = vrot.slane %v1788, 2
        %v1790 = vadd.f32 %v1788, %v1789
        %v1791 = vrot.slane %v1790, 1
        %v1792 = vadd.f32 %v1790, %v1791
        %v1793 = vmul.f32 %v1775, %v1775
        %v1794 = vmul.f32 %v1776, %v1776
        %v1795 = vmul.f32 %v1777, %v1777
        %v1796 = vmul.f32 %v1778, %v1778
        %v1797 = vadd.f32 %v1793, %v1795
        %v1798 = vrot.slane %v1797, 4
        %v1799 = vadd.f32 %v1797, %v1798
        %v1800 = vrot.slane %v1799, 2
        %v1801 = vadd.f32 %v1799, %v1800
        %v1802 = vrot.slane %v1801, 1
        %v1803 = vadd.f32 %v1801, %v1802
        %v1804 = vadd.f32 %v1794, %v1796
        %v1805 = vrot.slane %v1804, 4
        %v1806 = vadd.f32 %v1804, %v1805
        %v1807 = vrot.slane %v1806, 2
        %v1808 = vadd.f32 %v1806, %v1807
        %v1809 = vrot.slane %v1808, 1
        %v1810 = vadd.f32 %v1808, %v1809
        %v1811 = vsel %vm465, %v1785, %v1803
        %v1812 = vsel %vm465, %v1792, %v1810
        %1813 = vmatprep.subr.mxu0 0.0
        %1814 = vmatpush1.msra.mxu0 %v439
        %1815 = vmatprep.subr.mxu0 0.0
        %1816 = vmatpush1.msra.mxu0 %v438
        %1817 = vmatprep.subr.mxu0 0.0
        %1818 = vmatpush1.msra.mxu0 %v437
        %1819 = vmatprep.subr.mxu0 0.0
        %1820 = vmatpush1.msra.mxu0 %v436
        %1821 = vmatprep.subr.mxu0 0.0
        %1822 = vmatpush1.msra.mxu0 %v435
        %1823 = vmatprep.subr.mxu0 0.0
        %1824 = vmatpush1.msra.mxu0 %v434
        %1825 = vmatprep.subr.mxu0 0.0
        %1826 = vmatpush1.msra.mxu0 %v433
        %1827 = vmatprep.subr.mxu0 0.0
        %1828 = vmatpush1.msra.mxu0 %v432
        %1829 = vmatprep.subr.mxu0 0.0
        %1830 = vmatpush1.msra.mxu0 %v431
        %1831 = vmatprep.subr.mxu0 0.0
        %1832 = vmatpush1.msra.mxu0 %v430
        %1833 = vmatprep.subr.mxu0 0.0
        %1834 = vmatpush1.msra.mxu0 %v429
        %1835 = vmatprep.subr.mxu0 0.0
        %1836 = vmatpush1.msra.mxu0 %v428
        %1837 = vmatprep.subr.mxu0 0.0
        %1838 = vmatpush1.msra.mxu0 %v427
        %1839 = vmatprep.subr.mxu0 0.0
        %1840 = vmatpush1.msra.mxu0 %v426
        %1841 = vmatprep.subr.mxu0 0.0
        %1842 = vmatpush1.msra.mxu0 %v425
        %1843 = vmatprep.subr.mxu0 0.0
        %1844 = vmatpush1.msra.mxu0 %v424
        %1845 = vmatprep.subr.mxu0 0.0
        %1846 = vmatpush2.msra.mxu0 %v455
        %1847 = vmatprep.subr.mxu0 0.0
        %1848 = vmatpush2.msra.mxu0 %v454
        %1849 = vmatprep.subr.mxu0 0.0
        %1850 = vmatpush2.msra.mxu0 %v453
        %1851 = vmatprep.subr.mxu0 0.0
        %1852 = vmatpush2.msra.mxu0 %v452
        %1853 = vmatprep.subr.mxu0 0.0
        %1854 = vmatpush2.msra.mxu0 %v451
        %1855 = vmatprep.subr.mxu0 0.0
        %1856 = vmatpush2.msra.mxu0 %v450
        %1857 = vmatprep.subr.mxu0 0.0
        %1858 = vmatpush2.msra.mxu0 %v449
        %1859 = vmatprep.subr.mxu0 0.0
        %1860 = vmatpush2.msra.mxu0 %v448
        %1861 = vmatprep.subr.mxu0 0.0
        %1862 = vmatpush2.msra.mxu0 %v447
        %1863 = vmatprep.subr.mxu0 0.0
        %1864 = vmatpush2.msra.mxu0 %v446
        %1865 = vmatprep.subr.mxu0 0.0
        %1866 = vmatpush2.msra.mxu0 %v445
        %1867 = vmatprep.subr.mxu0 0.0
        %1868 = vmatpush2.msra.mxu0 %v444
        %1869 = vmatprep.subr.mxu0 0.0
        %1870 = vmatpush2.msra.mxu0 %v443
        %1871 = vmatprep.subr.mxu0 0.0
        %1872 = vmatpush2.msra.mxu0 %v442
        %1873 = vmatprep.subr.mxu0 0.0
        %1874 = vmatpush2.msra.mxu0 %v441
        %1875 = vmatprep.subr.mxu0 0.0
        %1876 = vmatpush2.msra.mxu0 %v440
        %1877 = vmatprep.mubr.f32.mxu0 %v1812
        %1878 = vmatmul.mubr.f32.gmra.mxu0 %v1811
        %v1879 = vpop.f32.mrf.mxu0
        %v1880 = vadd.f32 0.0, %v1879
        %v1881 = vpop.f32.mrf.mxu0
        %1882 = vdwg.mxu0
        %v1883 = vmul.f32 %v1880, 0.00048828125
        %v1884 = vmul.f32 %v1883, %v1883
        %v1886 = vrot.slane %v1884, 7
        %v1888 = vsub.f32 %v1883, %v1886
        %v1889 = vadd.f32 %v1888, 1e-05
        %v1890 = vrsqrt.pop %v1889
        %v1891 = vsel %vm465, %v1883, %v1890
        %v1893 = vsel %vm1105, %v1891, 0
        %1895 = vmatprep.subr.mxu0 0.0
        %1896 = vmatpush1.msra.mxu0 0.0
        %1897 = vmatprep.subr.mxu0 0.0
        %1898 = vmatpush1.msra.mxu0 0.0
        %1899 = vmatprep.subr.mxu0 0.0
        %1900 = vmatpush1.msra.mxu0 0.0
        %1901 = vmatprep.subr.mxu0 0.0
        %1902 = vmatpush1.msra.mxu0 0.0
        %1903 = vmatprep.subr.mxu0 0.0
        %1904 = vmatpush1.msra.mxu0 0.0
        %1905 = vmatprep.subr.mxu0 0.0
        %1906 = vmatpush1.msra.mxu0 0.0
        %1907 = vmatprep.subr.mxu0 0.0
        %1908 = vmatpush1.msra.mxu0 0.0
        %1909 = vmatprep.subr.mxu0 0.0
        %1910 = vmatpush1.msra.mxu0 0.0
        %1911 = vmatprep.subr.mxu0 0.0
        %1912 = vmatpush1.msra.mxu0 0.0
        %1913 = vmatprep.subr.mxu0 0.0
        %1914 = vmatpush1.msra.mxu0 0.0
        %1915 = vmatprep.subr.mxu0 0.0
        %1916 = vmatpush1.msra.mxu0 0.0
        %1917 = vmatprep.subr.mxu0 0.0
        %1918 = vmatpush1.msra.mxu0 0.0
        %1919 = vmatprep.subr.mxu0 0.0
        %1920 = vmatpush1.msra.mxu0 0.0
        %1921 = vmatprep.subr.mxu0 0.0
        %1922 = vmatpush1.msra.mxu0 0.0
        %1923 = vmatprep.subr.mxu0 0.0
        %1924 = vmatpush1.msra.mxu0 0.0
        %1925 = vmatprep.subr.mxu0 %v1112
        %1926 = vmatpush1.msra.mxu0 %v1110
        %1927 = vmatprep.subr.mxu0 0.0
        %1928 = vmatpush2.msra.mxu0 0.0
        %1929 = vmatprep.subr.mxu0 0.0
        %1930 = vmatpush2.msra.mxu0 0.0
        %1931 = vmatprep.subr.mxu0 0.0
        %1932 = vmatpush2.msra.mxu0 0.0
        %1933 = vmatprep.subr.mxu0 0.0
        %1934 = vmatpush2.msra.mxu0 0.0
        %1935 = vmatprep.subr.mxu0 0.0
        %1936 = vmatpush2.msra.mxu0 0.0
        %1937 = vmatprep.subr.mxu0 0.0
        %1938 = vmatpush2.msra.mxu0 0.0
        %1939 = vmatprep.subr.mxu0 0.0
        %1940 = vmatpush2.msra.mxu0 0.0
        %1941 = vmatprep.subr.mxu0 0.0
        %1942 = vmatpush2.msra.mxu0 0.0
        %1943 = vmatprep.subr.mxu0 0.0
        %1944 = vmatpush2.msra.mxu0 0.0
        %1945 = vmatprep.subr.mxu0 0.0
        %1946 = vmatpush2.msra.mxu0 0.0
        %1947 = vmatprep.subr.mxu0 0.0
        %1948 = vmatpush2.msra.mxu0 0.0
        %1949 = vmatprep.subr.mxu0 0.0
        %1950 = vmatpush2.msra.mxu0 0.0
        %1951 = vmatprep.subr.mxu0 0.0
        %1952 = vmatpush2.msra.mxu0 0.0
        %1953 = vmatprep.subr.mxu0 0.0
        %1954 = vmatpush2.msra.mxu0 0.0
        %1955 = vmatprep.subr.mxu0 0.0
        %1956 = vmatpush2.msra.mxu0 0.0
        %1957 = vmatprep.subr.mxu0 0.0
        %1958 = vmatpush2.msra.mxu0 0.0
        %1959 = vmatprep.mubr.f32.mxu0 0.0
        %1960 = vmatmul.mubr.f32.gmra.mxu0 %v1893
        %v1961 = vpop.f32.mrf.mxu0
        %v1962 = vadd.f32 0.0, %v1961
        %v1963 = vpop.f32.mrf.mxu0
        %v1964 = vadd.f32 0.0, %v1963
        %1965 = vdwg.mxu0
        %v1968 = vcombine.low %v1962, %v1964
        %v1970 = vunpack.c.l.s4 1966171168
        %v1971 = vunpack.c.0.s8 %v1970
        %v1972 = vlaneseq
        %v1973 = vshrl.u32 %v1972, 7
        %v1974 = vsub.s32 %v1971, %v1973
        %v1975 = vrot.slane %v1968, %v1974
        %v1976 = vcombine.high %v1975, %v1975
        %v1978 = vunpack.c.l.s4 1966171168
        %v1979 = vunpack.c.0.s8 %v1978
        %v1980 = vlaneseq
        %v1981 = vshrl.u32 %v1980, 7
        %v1982 = vsub.s32 %v1979, %v1981
        %v1983 = vrot.slane %v1976, %v1982
        %v1985 = vmul.f32 %v1762, %v1983
        %v1987 = vlaneseq
        %v1988 = vshrl.u32 %v1987, 7
        %v1989 = vsub.s32 0, %v1988
        %v1990 = vrot.slane %v1985, %v1989
        %v1991 = vlaneseq
        %v1992 = vshrl.u32 %v1991, 7
        %v1993 = vsub.s32 1, %v1992
        %v1994 = vrot.slane %v1985, %v1993
        %v1997 = vmul.f32 %v1962, %v1990
        %v1998 = vmul.f32 %v1964, %v1994
        %v2001 = vcombine.low %v1997, %v1998
        %v2003 = vunpack.c.l.s4 1966171168
        %v2004 = vunpack.c.0.s8 %v2003
        %v2005 = vlaneseq
        %v2006 = vshrl.u32 %v2005, 7
        %v2007 = vsub.s32 %v2004, %v2006
        %v2008 = vrot.slane %v2001, %v2007
        %v2010 = vunpack.c.l.s4 1966171168
        %v2011 = vunpack.c.0.s8 %v2010
        %v2012 = vlaneseq
        %v2013 = vshrl.u32 %v2012, 7
        %v2014 = vsub.s32 %v2011, %v2013
        %v2015 = vrot.slane %v2008, %v2014
        %v2017 = vsub.f32 %v1763, %v2015
        %v2018 = vmul.f32 %v1775, %v1990
        %v2019 = vmul.f32 %v1776, %v1994
        %v2020 = vmul.f32 %v1777, %v1990
        %v2021 = vmul.f32 %v1778, %v1994
        %v2023 = vlaneseq
        %v2024 = vshrl.u32 %v2023, 7
        %v2025 = vsub.s32 0, %v2024
        %v2026 = vrot.slane %v2017, %v2025
        %v2027 = vlaneseq
        %v2028 = vshrl.u32 %v2027, 7
        %v2029 = vsub.s32 1, %v2028
        %v2030 = vrot.slane %v2017, %v2029
        %v2033 = vadd.f32 %v2018, %v2026
        %v2034 = vadd.f32 %v2019, %v2030
        %v2035 = vadd.f32 %v2020, %v2026
        %v2036 = vadd.f32 %v2021, %v2030
        %v2037 = vld [vmem:[%s414] sm:$0xff]
        %v2038 = vld [vmem:[%s414 + $0x8] sm:$0xff]
        %v2039 = vld [vmem:[%s414 + $0x10] sm:$0xff]
        %v2040 = vld [vmem:[%s414 + $0x18] sm:$0xff]
        %v2041 = vadd.f32 %v2037, %v2033
        %v2042 = vadd.f32 %v2038, %v2034
        %v2043 = vadd.f32 %v2039, %v2035
        %v2044 = vadd.f32 %v2040, %v2036
        %v2045 = vmax.f32 %v2041, 0.0
        %v2046 = vmax.f32 %v2042, 0.0
        %v2047 = vmax.f32 %v2043, 0.0
        %v2048 = vmax.f32 %v2044, 0.0
        %2049 = vst [vmem:[%s409] sm:$0xff] %v2045
        %2050 = vst [vmem:[%s409 + $0x8] sm:$0xff] %v2046
        %2051 = vst [vmem:[%s409 + $0x10] sm:$0xff] %v2047
        %2052 = vst [vmem:[%s409 + $0x18] sm:$0xff] %v2048
        %s2053 = sand.u32 %s271, 1
        %s2054 = scalar_lea.sflag [#allocation5], %s2053
        %s2055 = sand.u32 %s271, 1
        %s2056 = smul.addr %s2055, 32
        %s2057 = scalar_lea.vmem [#allocation8], %s2056
        // Predicated region
        $region73: #{tpu_custom_call.1} parent=63 // pred_check
          %p2058 = pneg %p281
        $region74: #{tpu_custom_call.1} parent=63 // pred_check_branch
          %2060 = sbr.rel (%p2058) target = $region76
        $region75: #{tpu_custom_call.1} parent=63 // pred_region
          %s2062 = ssub.s32 512, 512
          %2063 = vsyncadd %s2054, %s2062
          %s2064 = smul.addr %s27, 4
          %s2065 = smul.addr %s2064, 128
          %s2066 = scalar_lea.hbm %s11, %s2065
          %s2067 = sshll.u32 %s2057, 4
          %s2068 = int_to_ptr.vmem [resolvable:$true] %s2067
          %2073 = dma.vmem_to_hbm [thread:$0]  %s2068, 512, %s2066, %s2054, 256, 256, 16
        $region76: #{tpu_custom_call.1} parent=63 // pred_fallthru
          _
      $region64: #{tpu_custom_call.1} parent=5 // pred_fallthru
        _
      %p2074 = scmp.le.s32.totalorder 2, %s22
      // Predicated region
      $region77: #{tpu_custom_call.1} parent=5 // pred_check
        %p2075 = pneg %p2074
      $region78: #{tpu_custom_call.1} parent=5 // pred_check_branch
        %2077 = sbr.rel (%p2075) target = $region80
      $region79: #{tpu_custom_call.1} parent=5 // pred_region
        %s2078 = ssub.s32 %s22, 2
        // Predicated region
        $region81: #{tpu_custom_call.1} parent=79 // pred_check
          %p2079 = pneg %p287
        $region82: #{tpu_custom_call.1} parent=79 // pred_check_branch
          %2081 = sbr.rel (%p2079) target = $region84
        $region83: #{tpu_custom_call.1} parent=79 // pred_region
          %s2082 = sand.u32 %s272, 1
          %s2083 = scalar_lea.sflag [#allocation5], %s2082
          %s2084 = sand.u32 %s272, 1
          %s2085 = smul.addr %s2084, 32
          %s2086 = scalar_lea.vmem [#allocation8], %s2085
          %2087 = dma.done %s2083, 512
        $region84: #{tpu_custom_call.1} parent=79 // pred_fallthru
          _
      $region80: #{tpu_custom_call.1} parent=5 // pred_fallthru
        _
    $region6: #{tpu_custom_call.1} parent=1 // loop_footer
      %s26 = sadd.s32 1, %s22
    $region7: #{tpu_custom_call.1} parent=1 // loop_footer_branch
      %21 = sbr.rel target = $region3
    $region8: #{tpu_custom_call.1} parent=1 // loop_exit
      _
    %2088 = vsyncpa [#allocation4], 1
    %s2089 = scalar_lea.sflag [#allocation4], 1
    %2090 = vsyncpa %s2089, 1
    %2091 = vsyncpa [#allocation7], 1
    %2092 = vsyncpa [#allocation5], 1
    %s2093 = scalar_lea.sflag [#allocation5], 1
    %2094 = vsyncpa %s2093, 1

</llo_original>
